<compile_context>
chip_gen: v7x
topology: tpu7x:2x2x1
jax: 0.10.0
libtpu: 0.0.40
codegen_flags: <defaults>
</compile_context>

<pallas_src>
import jax
import jax.numpy as jnp
from jax.experimental import pallas as pl
from jax.experimental.pallas import tpu as pltpu

# ---------------- problem sizes (small, consistent with the module) -------------
B = 8            # batch
Z_DIM = 32       # latent dim z_dim
H_DIM = 64       # hidden dim (h_dim is an int -> 3 fc layers)
N_GRID = 8       # small grid so n_grid**3 = 512
N3 = N_GRID ** 3
VLD = 16         # voxel_latent_dim
ENC_H = 512      # voxel encoder hidden width (fixed by the module)
BN_EPS = 1e-5
SEG = 128        # lane-aligned segment stride for packed MLP weights
OUT_W = 128      # merged lane-dense output width (vlat lanes 0..15, y_hat lane 16)


# ------------------------------- Pallas kernel ----------------------------------
def sdf_kernel(vox_ref, z_ref, we_ref, ea_ref, we3_ref, mw_ref, wv_ref, ax_ref, out_ref):
    f32 = jnp.float32
    leaky = lambda v: jnp.where(v > 0, v, 0.01 * v)    # nn.LeakyReLU default slope
    relu = lambda v: jnp.maximum(v, 0.0)               # module default activation (F.relu)

    ea = ea_ref[...]                                   # (4, 512): [s1, s2, t1', t2'] (bias folded)
    ax = ax_ref[...]                                   # (8, 128): sm0-2, tm0-2, be3, bl-row

    # ---- voxel encoder: two 512x512 layers, bf16 x bf16 on the MXU ----------------
    a1 = jnp.dot(vox_ref[...].astype(jnp.bfloat16), we_ref[0],
                 preferred_element_type=f32)           # (B, 512)
    h1 = leaky(a1 * ea[0:1, :] + ea[2:3, :])           # eval-BN folded; Dropout1d = identity

    a2 = jnp.dot(h1.astype(jnp.bfloat16), we_ref[1], preferred_element_type=f32)
    h2 = leaky(a2 * ea[1:2, :] + ea[3:4, :])

    vlat = jnp.dot(h2, we3_ref[...], preferred_element_type=f32) + ax[6:7, :VLD]   # (B, VLD)

    # All voxel-latent contributions (3 hidden layers + logits) in ONE matmul, off the
    # serial x-chain; segments live at 128-lane-aligned offsets.
    vall = jnp.dot(vlat, wv_ref[...], preferred_element_type=f32)                  # (B, 512)

    # ---- MLP x-chain (x-side weights sliced straight from the packed ref) --------
    x = z_ref[...]                                                                  # (B, Z_DIM)
    x = relu((jnp.dot(x, mw_ref[:Z_DIM, 0:H_DIM], preferred_element_type=f32)
              + vall[:, 0:H_DIM]) * ax[0:1, :H_DIM] + ax[3:4, :H_DIM])
    x = relu((jnp.dot(x, mw_ref[:, SEG:SEG + H_DIM], preferred_element_type=f32)
              + vall[:, SEG:SEG + H_DIM]) * ax[1:2, :H_DIM] + ax[4:5, :H_DIM])
    x = relu((jnp.dot(x, mw_ref[:, 2 * SEG:2 * SEG + H_DIM], preferred_element_type=f32)
              + vall[:, 2 * SEG:2 * SEG + H_DIM]) * ax[2:3, :H_DIM] + ax[5:6, :H_DIM])

    # ---- logits: wlz sits in column 3*SEG+VLD of mw, wlv in the same column of wv,
    # bl at lane VLD of ax row 7 -> y_hat lands at lane 16 of the 128-wide output;
    # all other lanes of yfull are exactly zero.
    yfull = (jnp.dot(x, mw_ref[:, 3 * SEG:4 * SEG], preferred_element_type=f32)
             + vall[:, 3 * SEG:4 * SEG] + ax[7:8, :])                               # (B, 128)
    out_ref[...] = yfull
    out_ref[:, 0:VLD] = vlat                          # lanes 0..15 <- voxel latent


# ------------------------------- wrapper ----------------------------------------
def _full_spec(a):
    n = a.ndim
    return pl.BlockSpec(a.shape, lambda i: (0,) * n)   # whole array, fetched once


def sdf_distance_forward(z, voxel, kparams):
    """Fused SDFDistanceNet forward. Returns (y_hat[B,1], voxel_latent[B,VLD])."""
    we_stack, enc_aux, we3, mlp_w, wv_all, mlp_aux = kparams
    Bn = z.shape[0]
    args = (voxel, z, we_stack, enc_aux, we3, mlp_w, wv_all, mlp_aux)
    out = pl.pallas_call(
        sdf_kernel,
        out_shape=jax.ShapeDtypeStruct((Bn, OUT_W), jnp.float32),
        grid=(1,),
        in_specs=[_full_spec(a) for a in args],
        out_specs=pl.BlockSpec((Bn, OUT_W), lambda i: (0, 0)),
        compiler_params=pltpu.CompilerParams(
            dimension_semantics=("arbitrary",),
            vmem_limit_bytes=16 << 20,   # footprint is ~2.5 MiB; plenty on v5e/v6e/v7x
        ),
    )(*args)
    y_hat = out[:, VLD:VLD + 1]
    vlat = out[:, :VLD]
    return y_hat, vlat


# ------------------------ deterministic parameter init --------------------------
def _linear_params(key, fan_in, fan_out):
    kw, kb = jax.random.split(key)
    bound = 1.0 / (fan_in ** 0.5)
    w = jax.random.uniform(kw, (fan_in, fan_out), jnp.float32, -bound, bound)
    b = jax.random.uniform(kb, (1, fan_out), jnp.float32, -bound, bound)
    return w, b


def _bn_scale_shift(key, dim):
    k1, k2, k3, k4 = jax.random.split(key, 4)
    gamma = jax.random.uniform(k1, (1, dim), jnp.float32, 0.5, 1.5)
    beta = 0.1 * jax.random.normal(k2, (1, dim), jnp.float32)
    mean = 0.1 * jax.random.normal(k3, (1, dim), jnp.float32)
    var = jax.random.uniform(k4, (1, dim), jnp.float32, 0.5, 1.5)
    scale = gamma / jnp.sqrt(var + BN_EPS)
    shift = beta - mean * scale
    return scale, shift


def make_module_params(key):
    """Module-style parameters (weights already in (in, out) layout)."""
    keys = jax.random.split(key, 12)
    we1, be1 = _linear_params(keys[0], N3, ENC_H)
    s1, t1 = _bn_scale_shift(keys[1], ENC_H)
    we2, be2 = _linear_params(keys[2], ENC_H, ENC_H)
    s2, t2 = _bn_scale_shift(keys[3], ENC_H)
    we3, be3 = _linear_params(keys[4], ENC_H, VLD)
    # Keep the two big encoder weights bf16-representable so the kernel's bf16 storage
    # (the dominant HBM-byte optimization) is lossless for this test.
    we1 = we1.astype(jnp.bfloat16).astype(jnp.float32)
    we2 = we2.astype(jnp.bfloat16).astype(jnp.float32)
    mlp = []
    in_dims = [Z_DIM + VLD, H_DIM + VLD, H_DIM + VLD]
    for i, din in enumerate(in_dims):
        w_full, b = _linear_params(keys[5 + 2 * i], din, H_DIM)
        sm, tm = _bn_scale_shift(keys[6 + 2 * i], H_DIM)
        mlp.append((w_full, b, sm, tm))
    wl_full, bl = _linear_params(keys[11], H_DIM + VLD, 1)
    return dict(we1=we1, be1=be1, s1=s1, t1=t1, we2=we2, be2=be2, s2=s2, t2=t2,
                we3=we3, be3=be3, mlp=mlp, wl=wl_full, bl=bl)


def prepare_kernel_params(p):
    """Fold biases into eval-BN shifts, stack encoder layers, pack small params lane-densely."""
    # -- encoder: fold Linear bias into folded-BN shift, stack the two 512x512 layers (bf16)
    t1 = p["be1"] * p["s1"] + p["t1"]
    t2 = p["be2"] * p["s2"] + p["t2"]
    we_stack = jnp.stack([p["we1"], p["we2"]]).astype(jnp.bfloat16)      # (2, 512, 512)
    enc_aux = jnp.concatenate([p["s1"], p["s2"], t1, t2], axis=0)        # (4, 512)

    # -- MLP: split cat(x, vlat) weights, fold Linear biases into BN shifts
    wz, wv, sm, tm = [], [], [], []
    for w_full, b, s, t in p["mlp"]:
        din = w_full.shape[0]
        wz.append(w_full[: din - VLD, :])          # x-side weight
        wv.append(w_full[din - VLD:, :])           # voxel-latent-side weight
        sm.append(s)
        tm.append(b * s + t)
    wlz = p["wl"][:H_DIM, :]                       # (H, 1)   logits x-side
    wlv = p["wl"][H_DIM:, :]                       # (VLD, 1) logits voxel-latent-side

    # -- x-side weights packed at 128-lane-aligned segments; logits column at lane 3*SEG+VLD
    mlp_w = jnp.zeros((H_DIM, 4 * SEG), jnp.float32)
    mlp_w = mlp_w.at[:Z_DIM, 0:H_DIM].set(wz[0])
    mlp_w = mlp_w.at[:, SEG:SEG + H_DIM].set(wz[1])
    mlp_w = mlp_w.at[:, 2 * SEG:2 * SEG + H_DIM].set(wz[2])
    mlp_w = mlp_w.at[:, 3 * SEG + VLD:3 * SEG + VLD + 1].set(wlz)

    # -- voxel-latent-side weights packed the same way
    wv_all = jnp.zeros((VLD, 4 * SEG), jnp.float32)
    wv_all = wv_all.at[:, 0:H_DIM].set(wv[0])
    wv_all = wv_all.at[:, SEG:SEG + H_DIM].set(wv[1])
    wv_all = wv_all.at[:, 2 * SEG:2 * SEG + H_DIM].set(wv[2])
    wv_all = wv_all.at[:, 3 * SEG + VLD:3 * SEG + VLD + 1].set(wlv)

    # -- per-layer scale / shift + be3 + logits bias in one (8, 128) f32 blob (one vreg)
    mlp_aux = jnp.zeros((8, SEG), jnp.float32)
    for i in range(3):
        mlp_aux = mlp_aux.at[i, :H_DIM].set(sm[i][0])
        mlp_aux = mlp_aux.at[3 + i, :H_DIM].set(tm[i][0])
    mlp_aux = mlp_aux.at[6, :VLD].set(p["be3"][0])
    mlp_aux = mlp_aux.at[7, VLD].set(p["bl"][0, 0])

    return (we_stack, enc_aux, p["we3"], mlp_w, wv_all, mlp_aux)


# --------------------------- pure-JAX reference ----------------------------------
def reference_forward(z, voxel, p):
    """Direct transcription of the PyTorch forward (eval mode, c_dim == 0)."""
    leaky = lambda v: jnp.where(v > 0, v, 0.01 * v)
    relu = lambda v: jnp.maximum(v, 0.0)
    h = leaky((voxel @ p["we1"] + p["be1"]) * p["s1"] + p["t1"])
    h = leaky((h @ p["we2"] + p["be2"]) * p["s2"] + p["t2"])
    vlat = h @ p["we3"] + p["be3"]
    x = z
    for w_full, b, s, t in p["mlp"]:
        x = relu((jnp.concatenate([x, vlat], axis=1) @ w_full + b) * s + t)
    y = jnp.concatenate([x, vlat], axis=1) @ p["wl"] + p["bl"]
    return y, vlat


# ------------------------------------ main ---------------------------------------
if __name__ == "__main__":
    key = jax.random.PRNGKey(0)
    kz, kv, kp = jax.random.split(key, 3)
    z = jax.random.normal(kz, (B, Z_DIM), jnp.float32)
    voxel = (jax.random.uniform(kv, (B, N3), jnp.float32) > 0.7).astype(jnp.float32)
    mparams = make_module_params(kp)
    kparams = prepare_kernel_params(mparams)

    y_hat, vlat = sdf_distance_forward(z, voxel, kparams)
    jax.block_until_ready((y_hat, vlat))

    y_ref, vlat_ref = reference_forward(z, voxel, mparams)
    assert y_hat.shape == (B, 1) and vlat.shape == (B, VLD)
    assert jnp.allclose(vlat, vlat_ref, atol=2e-3, rtol=2e-3), \
        float(jnp.max(jnp.abs(vlat - vlat_ref)))
    assert jnp.allclose(y_hat, y_ref, atol=2e-3, rtol=2e-3), \
        float(jnp.max(jnp.abs(y_hat - y_ref)))

    print("KERNEL_OK")
</pallas_src>

<mosaic_0001>
module attributes {stable_mosaic.version = 11 : i64} {
  func.func @sdf_kernel(%arg0: i32, %arg1: memref<8x512xf32, #tpu.memory_space<vmem>>, %arg2: memref<8x32xf32, #tpu.memory_space<vmem>>, %arg3: memref<2x512x512xbf16, #tpu.memory_space<vmem>>, %arg4: memref<4x512xf32, #tpu.memory_space<vmem>>, %arg5: memref<512x16xf32, #tpu.memory_space<vmem>>, %arg6: memref<64x512xf32, #tpu.memory_space<vmem>>, %arg7: memref<16x512xf32, #tpu.memory_space<vmem>>, %arg8: memref<8x128xf32, #tpu.memory_space<vmem>>, %arg9: memref<8x128xf32, #tpu.memory_space<vmem>>) attributes {dimension_semantics = [#tpu.dimension_semantics<arbitrary>], iteration_bounds = array<i64: 1>, scalar_prefetch = 0 : i64, scratch_operands = 0 : i64, tpu.core_type = #tpu.core_type<tc>, window_params = [{pipeline_mode = #tpu.pipeline_mode<synchronous>, transform_indices = @transform_0, window_bounds = array<i64: 8, 512>}, {pipeline_mode = #tpu.pipeline_mode<synchronous>, transform_indices = @transform_1, window_bounds = array<i64: 8, 32>}, {pipeline_mode = #tpu.pipeline_mode<synchronous>, transform_indices = @transform_2, window_bounds = array<i64: 2, 512, 512>}, {pipeline_mode = #tpu.pipeline_mode<synchronous>, transform_indices = @transform_3, window_bounds = array<i64: 4, 512>}, {pipeline_mode = #tpu.pipeline_mode<synchronous>, transform_indices = @transform_4, window_bounds = array<i64: 512, 16>}, {pipeline_mode = #tpu.pipeline_mode<synchronous>, transform_indices = @transform_5, window_bounds = array<i64: 64, 512>}, {pipeline_mode = #tpu.pipeline_mode<synchronous>, transform_indices = @transform_6, window_bounds = array<i64: 16, 512>}, {pipeline_mode = #tpu.pipeline_mode<synchronous>, transform_indices = @transform_7, window_bounds = array<i64: 8, 128>}, {pipeline_mode = #tpu.pipeline_mode<synchronous>, transform_indices = @transform_8, window_bounds = array<i64: 8, 128>}]} {
    %c0 = arith.constant 0 : index
    %c0_0 = arith.constant 0 : index
    %0 = vector.load %arg4[%c0, %c0_0] : memref<4x512xf32, #tpu.memory_space<vmem>>, vector<4x512xf32>
    %c0_1 = arith.constant 0 : index
    %c0_2 = arith.constant 0 : index
    %1 = vector.load %arg8[%c0_1, %c0_2] : memref<8x128xf32, #tpu.memory_space<vmem>>, vector<8x128xf32>
    %c0_3 = arith.constant 0 : index
    %c0_4 = arith.constant 0 : index
    %2 = vector.load %arg1[%c0_3, %c0_4] : memref<8x512xf32, #tpu.memory_space<vmem>>, vector<8x512xf32>
    %3 = arith.truncf %2 : vector<8x512xf32> to vector<8x512xbf16>
    %c0_5 = arith.constant 0 : index
    %c0_6 = arith.constant 0 : index
    %c0_7 = arith.constant 0 : index
    %4 = vector.load %arg3[%c0_5, %c0_6, %c0_7] : memref<2x512x512xbf16, #tpu.memory_space<vmem>>, vector<1x512x512xbf16>
    %5 = vector.shape_cast %4 : vector<1x512x512xbf16> to vector<512x512xbf16>
    %cst = arith.constant dense<0.000000e+00> : vector<8x512xf32>
    %6 = tpu.matmul %3, %5, %cst {dimension_numbers = #tpu.dot_dimension_numbers<[1], [0], [0], [1], [0, 0, 1, 1], [], []>} : vector<8x512xbf16>, vector<512x512xbf16>, vector<8x512xf32> -> vector<8x512xf32>
    %7 = vector.extract_strided_slice %0 {offsets = [0, 0], sizes = [1, 512], strides = [1, 1]} : vector<4x512xf32> to vector<1x512xf32>
    %8 = vector.broadcast %7 : vector<1x512xf32> to vector<8x512xf32>
    %9 = arith.mulf %6, %8 : vector<8x512xf32>
    %10 = vector.extract_strided_slice %0 {offsets = [2, 0], sizes = [1, 512], strides = [1, 1]} : vector<4x512xf32> to vector<1x512xf32>
    %11 = vector.broadcast %10 : vector<1x512xf32> to vector<8x512xf32>
    %12 = arith.addf %9, %11 : vector<8x512xf32>
    %cst_8 = arith.constant 0.000000e+00 : f32
    %13 = vector.broadcast %cst_8 : f32 to vector<8x512xf32>
    %14 = arith.cmpf ogt, %12, %13 : vector<8x512xf32>
    %cst_9 = arith.constant 0.00999999977 : f32
    %15 = vector.broadcast %cst_9 : f32 to vector<8x512xf32>
    %16 = arith.mulf %15, %12 : vector<8x512xf32>
    %17 = arith.select %14, %12, %16 : vector<8x512xi1>, vector<8x512xf32>
    %18 = arith.truncf %17 : vector<8x512xf32> to vector<8x512xbf16>
    %c1 = arith.constant 1 : index
    %c0_10 = arith.constant 0 : index
    %c0_11 = arith.constant 0 : index
    %19 = vector.load %arg3[%c1, %c0_10, %c0_11] : memref<2x512x512xbf16, #tpu.memory_space<vmem>>, vector<1x512x512xbf16>
    %20 = vector.shape_cast %19 : vector<1x512x512xbf16> to vector<512x512xbf16>
    %cst_12 = arith.constant dense<0.000000e+00> : vector<8x512xf32>
    %21 = tpu.matmul %18, %20, %cst_12 {dimension_numbers = #tpu.dot_dimension_numbers<[1], [0], [0], [1], [0, 0, 1, 1], [], []>} : vector<8x512xbf16>, vector<512x512xbf16>, vector<8x512xf32> -> vector<8x512xf32>
    %22 = vector.extract_strided_slice %0 {offsets = [1, 0], sizes = [1, 512], strides = [1, 1]} : vector<4x512xf32> to vector<1x512xf32>
    %23 = vector.broadcast %22 : vector<1x512xf32> to vector<8x512xf32>
    %24 = arith.mulf %21, %23 : vector<8x512xf32>
    %25 = vector.extract_strided_slice %0 {offsets = [3, 0], sizes = [1, 512], strides = [1, 1]} : vector<4x512xf32> to vector<1x512xf32>
    %26 = vector.broadcast %25 : vector<1x512xf32> to vector<8x512xf32>
    %27 = arith.addf %24, %26 : vector<8x512xf32>
    %cst_13 = arith.constant 0.000000e+00 : f32
    %28 = vector.broadcast %cst_13 : f32 to vector<8x512xf32>
    %29 = arith.cmpf ogt, %27, %28 : vector<8x512xf32>
    %cst_14 = arith.constant 0.00999999977 : f32
    %30 = vector.broadcast %cst_14 : f32 to vector<8x512xf32>
    %31 = arith.mulf %30, %27 : vector<8x512xf32>
    %32 = arith.select %29, %27, %31 : vector<8x512xi1>, vector<8x512xf32>
    %c0_15 = arith.constant 0 : index
    %c0_16 = arith.constant 0 : index
    %33 = vector.load %arg5[%c0_15, %c0_16] : memref<512x16xf32, #tpu.memory_space<vmem>>, vector<512x16xf32>
    %cst_17 = arith.constant dense<0.000000e+00> : vector<8x16xf32>
    %34 = tpu.matmul %32, %33, %cst_17 {dimension_numbers = #tpu.dot_dimension_numbers<[1], [0], [0], [1], [0, 0, 1, 1], [], []>} : vector<8x512xf32>, vector<512x16xf32>, vector<8x16xf32> -> vector<8x16xf32>
    %35 = vector.extract_strided_slice %1 {offsets = [6, 0], sizes = [1, 16], strides = [1, 1]} : vector<8x128xf32> to vector<1x16xf32>
    %36 = vector.broadcast %35 : vector<1x16xf32> to vector<8x16xf32>
    %37 = arith.addf %34, %36 : vector<8x16xf32>
    %c0_18 = arith.constant 0 : index
    %c0_19 = arith.constant 0 : index
    %38 = vector.load %arg7[%c0_18, %c0_19] : memref<16x512xf32, #tpu.memory_space<vmem>>, vector<16x512xf32>
    %cst_20 = arith.constant dense<0.000000e+00> : vector<8x512xf32>
    %39 = tpu.matmul %37, %38, %cst_20 {dimension_numbers = #tpu.dot_dimension_numbers<[1], [0], [0], [1], [0, 0, 1, 1], [], []>} : vector<8x16xf32>, vector<16x512xf32>, vector<8x512xf32> -> vector<8x512xf32>
    %c0_21 = arith.constant 0 : index
    %c0_22 = arith.constant 0 : index
    %40 = vector.load %arg2[%c0_21, %c0_22] : memref<8x32xf32, #tpu.memory_space<vmem>>, vector<8x32xf32>
    %c0_23 = arith.constant 0 : index
    %c0_24 = arith.constant 0 : index
    %41 = vector.load %arg6[%c0_23, %c0_24] : memref<64x512xf32, #tpu.memory_space<vmem>>, vector<32x64xf32>
    %cst_25 = arith.constant dense<0.000000e+00> : vector<8x64xf32>
    %42 = tpu.matmul %40, %41, %cst_25 {dimension_numbers = #tpu.dot_dimension_numbers<[1], [0], [0], [1], [0, 0, 1, 1], [], []>} : vector<8x32xf32>, vector<32x64xf32>, vector<8x64xf32> -> vector<8x64xf32>
    %43 = vector.extract_strided_slice %39 {offsets = [0, 0], sizes = [8, 64], strides = [1, 1]} : vector<8x512xf32> to vector<8x64xf32>
    %44 = arith.addf %42, %43 : vector<8x64xf32>
    %45 = vector.extract_strided_slice %1 {offsets = [0, 0], sizes = [1, 64], strides = [1, 1]} : vector<8x128xf32> to vector<1x64xf32>
    %46 = vector.broadcast %45 : vector<1x64xf32> to vector<8x64xf32>
    %47 = arith.mulf %44, %46 : vector<8x64xf32>
    %48 = vector.extract_strided_slice %1 {offsets = [3, 0], sizes = [1, 64], strides = [1, 1]} : vector<8x128xf32> to vector<1x64xf32>
    %49 = vector.broadcast %48 : vector<1x64xf32> to vector<8x64xf32>
    %50 = arith.addf %47, %49 : vector<8x64xf32>
    %cst_26 = arith.constant 0.000000e+00 : f32
    %51 = vector.broadcast %cst_26 : f32 to vector<8x64xf32>
    %52 = arith.maximumf %50, %51 : vector<8x64xf32>
    %c0_27 = arith.constant 0 : index
    %c128 = arith.constant 128 : index
    %53 = vector.load %arg6[%c0_27, %c128] : memref<64x512xf32, #tpu.memory_space<vmem>>, vector<64x64xf32>
    %cst_28 = arith.constant dense<0.000000e+00> : vector<8x64xf32>
    %54 = tpu.matmul %52, %53, %cst_28 {dimension_numbers = #tpu.dot_dimension_numbers<[1], [0], [0], [1], [0, 0, 1, 1], [], []>} : vector<8x64xf32>, vector<64x64xf32>, vector<8x64xf32> -> vector<8x64xf32>
    %55 = vector.extract_strided_slice %39 {offsets = [0, 128], sizes = [8, 64], strides = [1, 1]} : vector<8x512xf32> to vector<8x64xf32>
    %56 = arith.addf %54, %55 : vector<8x64xf32>
    %57 = vector.extract_strided_slice %1 {offsets = [1, 0], sizes = [1, 64], strides = [1, 1]} : vector<8x128xf32> to vector<1x64xf32>
    %58 = vector.broadcast %57 : vector<1x64xf32> to vector<8x64xf32>
    %59 = arith.mulf %56, %58 : vector<8x64xf32>
    %60 = vector.extract_strided_slice %1 {offsets = [4, 0], sizes = [1, 64], strides = [1, 1]} : vector<8x128xf32> to vector<1x64xf32>
    %61 = vector.broadcast %60 : vector<1x64xf32> to vector<8x64xf32>
    %62 = arith.addf %59, %61 : vector<8x64xf32>
    %cst_29 = arith.constant 0.000000e+00 : f32
    %63 = vector.broadcast %cst_29 : f32 to vector<8x64xf32>
    %64 = arith.maximumf %62, %63 : vector<8x64xf32>
    %c0_30 = arith.constant 0 : index
    %c256 = arith.constant 256 : index
    %65 = vector.load %arg6[%c0_30, %c256] : memref<64x512xf32, #tpu.memory_space<vmem>>, vector<64x64xf32>
    %cst_31 = arith.constant dense<0.000000e+00> : vector<8x64xf32>
    %66 = tpu.matmul %64, %65, %cst_31 {dimension_numbers = #tpu.dot_dimension_numbers<[1], [0], [0], [1], [0, 0, 1, 1], [], []>} : vector<8x64xf32>, vector<64x64xf32>, vector<8x64xf32> -> vector<8x64xf32>
    %67 = vector.extract_strided_slice %39 {offsets = [0, 256], sizes = [8, 64], strides = [1, 1]} : vector<8x512xf32> to vector<8x64xf32>
    %68 = arith.addf %66, %67 : vector<8x64xf32>
    %69 = vector.extract_strided_slice %1 {offsets = [2, 0], sizes = [1, 64], strides = [1, 1]} : vector<8x128xf32> to vector<1x64xf32>
    %70 = vector.broadcast %69 : vector<1x64xf32> to vector<8x64xf32>
    %71 = arith.mulf %68, %70 : vector<8x64xf32>
    %72 = vector.extract_strided_slice %1 {offsets = [5, 0], sizes = [1, 64], strides = [1, 1]} : vector<8x128xf32> to vector<1x64xf32>
    %73 = vector.broadcast %72 : vector<1x64xf32> to vector<8x64xf32>
    %74 = arith.addf %71, %73 : vector<8x64xf32>
    %cst_32 = arith.constant 0.000000e+00 : f32
    %75 = vector.broadcast %cst_32 : f32 to vector<8x64xf32>
    %76 = arith.maximumf %74, %75 : vector<8x64xf32>
    %c0_33 = arith.constant 0 : index
    %c384 = arith.constant 384 : index
    %77 = vector.load %arg6[%c0_33, %c384] : memref<64x512xf32, #tpu.memory_space<vmem>>, vector<64x128xf32>
    %cst_34 = arith.constant dense<0.000000e+00> : vector<8x128xf32>
    %78 = tpu.matmul %76, %77, %cst_34 {dimension_numbers = #tpu.dot_dimension_numbers<[1], [0], [0], [1], [0, 0, 1, 1], [], []>} : vector<8x64xf32>, vector<64x128xf32>, vector<8x128xf32> -> vector<8x128xf32>
    %79 = vector.extract_strided_slice %39 {offsets = [0, 384], sizes = [8, 128], strides = [1, 1]} : vector<8x512xf32> to vector<8x128xf32>
    %80 = arith.addf %78, %79 : vector<8x128xf32>
    %81 = vector.extract_strided_slice %1 {offsets = [7, 0], sizes = [1, 128], strides = [1, 1]} : vector<8x128xf32> to vector<1x128xf32>
    %82 = vector.broadcast %81 : vector<1x128xf32> to vector<8x128xf32>
    %83 = arith.addf %80, %82 : vector<8x128xf32>
    %c0_35 = arith.constant 0 : index
    %c0_36 = arith.constant 0 : index
    %84 = vector.load %arg9[%c0_35, %c0_36] : memref<8x128xf32, #tpu.memory_space<vmem>>, vector<8x128xf32>
    tpu.vector_store %arg9[%c0_35, %c0_36], %83 {strides = array<i32>} : memref<8x128xf32, #tpu.memory_space<vmem>>, vector<8x128xf32>,
    %c0_37 = arith.constant 0 : index
    %c0_38 = arith.constant 0 : index
    %85 = vector.load %arg9[%c0_37, %c0_38] : memref<8x128xf32, #tpu.memory_space<vmem>>, vector<8x16xf32>
    tpu.vector_store %arg9[%c0_37, %c0_38], %37 {strides = array<i32>} : memref<8x128xf32, #tpu.memory_space<vmem>>, vector<8x16xf32>,
    return
  }
  func.func @transform_0(%arg0: i32) -> (i32, i32) {
    %c0_i32 = arith.constant 0 : i32
    %c0_i32_0 = arith.constant 0 : i32
    %c0_i32_1 = arith.constant 0 : i32
    return %c0_i32, %c0_i32_0 : i32, i32
  }
  func.func @transform_1(%arg0: i32) -> (i32, i32) {
    %c0_i32 = arith.constant 0 : i32
    %c0_i32_0 = arith.constant 0 : i32
    %c0_i32_1 = arith.constant 0 : i32
    return %c0_i32, %c0_i32_0 : i32, i32
  }
  func.func @transform_2(%arg0: i32) -> (i32, i32, i32) {
    %c0_i32 = arith.constant 0 : i32
    %c0_i32_0 = arith.constant 0 : i32
    %c0_i32_1 = arith.constant 0 : i32
    %c0_i32_2 = arith.constant 0 : i32
    return %c0_i32, %c0_i32_0, %c0_i32_1 : i32, i32, i32
  }
  func.func @transform_3(%arg0: i32) -> (i32, i32) {
    %c0_i32 = arith.constant 0 : i32
    %c0_i32_0 = arith.constant 0 : i32
    %c0_i32_1 = arith.constant 0 : i32
    return %c0_i32, %c0_i32_0 : i32, i32
  }
  func.func @transform_4(%arg0: i32) -> (i32, i32) {
    %c0_i32 = arith.constant 0 : i32
    %c0_i32_0 = arith.constant 0 : i32
    %c0_i32_1 = arith.constant 0 : i32
    return %c0_i32, %c0_i32_0 : i32, i32
  }
  func.func @transform_5(%arg0: i32) -> (i32, i32) {
    %c0_i32 = arith.constant 0 : i32
    %c0_i32_0 = arith.constant 0 : i32
    %c0_i32_1 = arith.constant 0 : i32
    return %c0_i32, %c0_i32_0 : i32, i32
  }
  func.func @transform_6(%arg0: i32) -> (i32, i32) {
    %c0_i32 = arith.constant 0 : i32
    %c0_i32_0 = arith.constant 0 : i32
    %c0_i32_1 = arith.constant 0 : i32
    return %c0_i32, %c0_i32_0 : i32, i32
  }
  func.func @transform_7(%arg0: i32) -> (i32, i32) {
    %c0_i32 = arith.constant 0 : i32
    %c0_i32_0 = arith.constant 0 : i32
    %c0_i32_1 = arith.constant 0 : i32
    return %c0_i32, %c0_i32_0 : i32, i32
  }
  func.func @transform_8(%arg0: i32) -> (i32, i32) {
    %c0_i32 = arith.constant 0 : i32
    %c0_i32_0 = arith.constant 0 : i32
    %c0_i32_1 = arith.constant 0 : i32
    return %c0_i32, %c0_i32_0 : i32, i32
  }
}

</mosaic_0001>

<llo_original>
// kernel: tpu_custom_call.1
$region0: #{tpu_custom_call.1}
  #allocation0 [shape = 'u32[]', space=smem, size = 0x4, offset = 0x4, fixed_abs, tag = 'smem constant byte address 0x4 - core index']
  #allocation1 [shape = 'u32[144,128]{1,0:T(1,128)}', space=vmem, size = 0x12000, scoped, tag = 'internal scratch']
  %s0 = inlined_call_operand.vmem [shape: f32[8,512], index: 0, kind: input, shape index: {}]
  %s1 = inlined_call_operand.vmem [shape: f32[8,32], index: 1, kind: input, shape index: {}]
  %s2 = inlined_call_operand.hbm [shape: bf16[2,512,512], index: 2, kind: input, shape index: {}]
  %s3 = inlined_call_operand.vmem [shape: f32[4,512], index: 3, kind: input, shape index: {}]
  %s4 = inlined_call_operand.vmem [shape: f32[512,16], index: 4, kind: input, shape index: {}]
  %s5 = inlined_call_operand.vmem [shape: f32[64,512], index: 5, kind: input, shape index: {}]
  %s6 = inlined_call_operand.vmem [shape: f32[16,512], index: 6, kind: input, shape index: {}]
  %s7 = inlined_call_operand.vmem [shape: f32[8,128], index: 7, kind: input, shape index: {}]
  %s8 = inlined_call_operand.hbm [shape: f32[8,128], index: 8, kind: output, shape index: {}]
  %s9 = sld [smem:[#allocation0]]
  $region46: #{tpu_custom_call.1} parent=0
    _
  %s11 = ssub.s32 1, %s9
  %s12 = scalar_select 0, %s11, %s9
  $region1: #{tpu_custom_call.1} parent=0
    #allocation2 [shape = 'u8[1048576]{0}', space=vmem, size = 0x100000, scoped, tag = 'input window, operand 2, single buffered']
    #allocation3 [shape = 's32[1]{0}', space=sflag, size = 0x4, scoped, tag = 'scoped memory for tpu_custom_call.1']
    #allocation4 [shape = 's32[1]{0}', space=sflag, size = 0x4, scoped, tag = 'scoped memory for tpu_custom_call.1']
    #allocation5 [shape = 'u8[4096]{0}', space=vmem, size = 0x1000, scoped, tag = 'output window, operand 0, single buffered']
    %13 = vsyncpa [#allocation3], 0
    %14 = vsyncpa [#allocation4], 0
    // Predicated region
    $region2: #{tpu_custom_call.1} parent=1 // pred_check
      _
    $region3: #{tpu_custom_call.1} parent=1 // pred_check_branch
      %16 = sbr.rel (0) target = $region5
    $region4: #{tpu_custom_call.1} parent=1 // pred_region
      _
    $region5: #{tpu_custom_call.1} parent=1 // pred_fallthru
      _
    // Predicated region
    $region6: #{tpu_custom_call.1} parent=1 // pred_check
      _
    $region7: #{tpu_custom_call.1} parent=1 // pred_check_branch
      %18 = sbr.rel (0) target = $region9
    $region8: #{tpu_custom_call.1} parent=1 // pred_region
      _
    $region9: #{tpu_custom_call.1} parent=1 // pred_fallthru
      _
    // Predicated region
    $region10: #{tpu_custom_call.1} parent=1 // pred_check
      _
    $region11: #{tpu_custom_call.1} parent=1 // pred_check_branch
      %20 = sbr.rel (0) target = $region13
    $region12: #{tpu_custom_call.1} parent=1 // pred_region
      %s22 = ssub.s32 32768, 32768
      %23 = vsyncadd [#allocation3], %s22
      %s24 = sshll.u32 [#allocation2], 4
      %s25 = int_to_ptr.vmem [resolvable:$true] %s24
      %30 = dma.hbm_to_vmem [thread:$0]  %s2, 32768, %s25, [#allocation3], 256, 256, 16
    $region13: #{tpu_custom_call.1} parent=1 // pred_fallthru
      _
    // Predicated region
    $region14: #{tpu_custom_call.1} parent=1 // pred_check
      _
    $region15: #{tpu_custom_call.1} parent=1 // pred_check_branch
      %32 = sbr.rel (0) target = $region17
    $region16: #{tpu_custom_call.1} parent=1 // pred_region
      _
    $region17: #{tpu_custom_call.1} parent=1 // pred_fallthru
      _
    // Predicated region
    $region18: #{tpu_custom_call.1} parent=1 // pred_check
      _
    $region19: #{tpu_custom_call.1} parent=1 // pred_check_branch
      %34 = sbr.rel (0) target = $region21
    $region20: #{tpu_custom_call.1} parent=1 // pred_region
      _
    $region21: #{tpu_custom_call.1} parent=1 // pred_fallthru
      _
    // Predicated region
    $region22: #{tpu_custom_call.1} parent=1 // pred_check
      _
    $region23: #{tpu_custom_call.1} parent=1 // pred_check_branch
      %36 = sbr.rel (0) target = $region25
    $region24: #{tpu_custom_call.1} parent=1 // pred_region
      _
    $region25: #{tpu_custom_call.1} parent=1 // pred_fallthru
      _
    // Predicated region
    $region26: #{tpu_custom_call.1} parent=1 // pred_check
      _
    $region27: #{tpu_custom_call.1} parent=1 // pred_check_branch
      %38 = sbr.rel (0) target = $region29
    $region28: #{tpu_custom_call.1} parent=1 // pred_region
      _
    $region29: #{tpu_custom_call.1} parent=1 // pred_fallthru
      _
    // Predicated region
    $region30: #{tpu_custom_call.1} parent=1 // pred_check
      _
    $region31: #{tpu_custom_call.1} parent=1 // pred_check_branch
      %40 = sbr.rel (0) target = $region33
    $region32: #{tpu_custom_call.1} parent=1 // pred_region
      _
    $region33: #{tpu_custom_call.1} parent=1 // pred_fallthru
      _
    // Predicated region
    $region34: #{tpu_custom_call.1} parent=1 // pred_check
      _
    $region35: #{tpu_custom_call.1} parent=1 // pred_check_branch
      %42 = sbr.rel (0) target = $region37
    $region36: #{tpu_custom_call.1} parent=1 // pred_region
      %43 = dma.done [#allocation3], 32768
    $region37: #{tpu_custom_call.1} parent=1 // pred_fallthru
      _
    %v44 = vld [vmem:[%s3] sm:$0xff]
    %v45 = vld [vmem:[%s3 + $0x8] sm:$0xff]
    %v46 = vld [vmem:[%s7] sm:$0xff]
    %v47 = vld [vmem:[%s0] sm:$0xff]
    %v48 = vld [vmem:[%s0 + $0x8] sm:$0xff]
    %v49 = vld [vmem:[%s0 + $0x10] sm:$0xff]
    %v50 = vld [vmem:[%s0 + $0x18] sm:$0xff]
    %v51 = vpack.c.bf16 %v47, %v47
    %v52 = vpack.c.bf16 %v48, %v48
    %v53 = vpack.c.bf16 %v49, %v49
    %v54 = vpack.c.bf16 %v50, %v50
    %v55 = vld [vmem:[#allocation2] sm:$0xff]
    %v56 = vld [vmem:[#allocation2 + $0x8] sm:$0xff]
    %v57 = vld [vmem:[#allocation2 + $0x10] sm:$0xff]
    %v58 = vld [vmem:[#allocation2 + $0x18] sm:$0xff]
    %v59 = vld [vmem:[#allocation2 + $0x20] sm:$0xff]
    %v60 = vld [vmem:[#allocation2 + $0x28] sm:$0xff]
    %v61 = vld [vmem:[#allocation2 + $0x30] sm:$0xff]
    %v62 = vld [vmem:[#allocation2 + $0x38] sm:$0xff]
    %v63 = vld [vmem:[#allocation2 + $0x40] sm:$0xff]
    %v64 = vld [vmem:[#allocation2 + $0x48] sm:$0xff]
    %v65 = vld [vmem:[#allocation2 + $0x50] sm:$0xff]
    %v66 = vld [vmem:[#allocation2 + $0x58] sm:$0xff]
    %v67 = vld [vmem:[#allocation2 + $0x60] sm:$0xff]
    %v68 = vld [vmem:[#allocation2 + $0x68] sm:$0xff]
    %v69 = vld [vmem:[#allocation2 + $0x70] sm:$0xff]
    %v70 = vld [vmem:[#allocation2 + $0x78] sm:$0xff]
    %v71 = vld [vmem:[#allocation2 + $0x80] sm:$0xff]
    %v72 = vld [vmem:[#allocation2 + $0x88] sm:$0xff]
    %v73 = vld [vmem:[#allocation2 + $0x90] sm:$0xff]
    %v74 = vld [vmem:[#allocation2 + $0x98] sm:$0xff]
    %v75 = vld [vmem:[#allocation2 + $0xa0] sm:$0xff]
    %v76 = vld [vmem:[#allocation2 + $0xa8] sm:$0xff]
    %v77 = vld [vmem:[#allocation2 + $0xb0] sm:$0xff]
    %v78 = vld [vmem:[#allocation2 + $0xb8] sm:$0xff]
    %v79 = vld [vmem:[#allocation2 + $0xc0] sm:$0xff]
    %v80 = vld [vmem:[#allocation2 + $0xc8] sm:$0xff]
    %v81 = vld [vmem:[#allocation2 + $0xd0] sm:$0xff]
    %v82 = vld [vmem:[#allocation2 + $0xd8] sm:$0xff]
    %v83 = vld [vmem:[#allocation2 + $0xe0] sm:$0xff]
    %v84 = vld [vmem:[#allocation2 + $0xe8] sm:$0xff]
    %v85 = vld [vmem:[#allocation2 + $0xf0] sm:$0xff]
    %v86 = vld [vmem:[#allocation2 + $0xf8] sm:$0xff]
    %v87 = vld [vmem:[#allocation2 + $0x100] sm:$0xff]
    %v88 = vld [vmem:[#allocation2 + $0x108] sm:$0xff]
    %v89 = vld [vmem:[#allocation2 + $0x110] sm:$0xff]
    %v90 = vld [vmem:[#allocation2 + $0x118] sm:$0xff]
    %v91 = vld [vmem:[#allocation2 + $0x120] sm:$0xff]
    %v92 = vld [vmem:[#allocation2 + $0x128] sm:$0xff]
    %v93 = vld [vmem:[#allocation2 + $0x130] sm:$0xff]
    %v94 = vld [vmem:[#allocation2 + $0x138] sm:$0xff]
    %v95 = vld [vmem:[#allocation2 + $0x140] sm:$0xff]
    %v96 = vld [vmem:[#allocation2 + $0x148] sm:$0xff]
    %v97 = vld [vmem:[#allocation2 + $0x150] sm:$0xff]
    %v98 = vld [vmem:[#allocation2 + $0x158] sm:$0xff]
    %v99 = vld [vmem:[#allocation2 + $0x160] sm:$0xff]
    %v100 = vld [vmem:[#allocation2 + $0x168] sm:$0xff]
    %v101 = vld [vmem:[#allocation2 + $0x170] sm:$0xff]
    %v102 = vld [vmem:[#allocation2 + $0x178] sm:$0xff]
    %v103 = vld [vmem:[#allocation2 + $0x180] sm:$0xff]
    %v104 = vld [vmem:[#allocation2 + $0x188] sm:$0xff]
    %v105 = vld [vmem:[#allocation2 + $0x190] sm:$0xff]
    %v106 = vld [vmem:[#allocation2 + $0x198] sm:$0xff]
    %v107 = vld [vmem:[#allocation2 + $0x1a0] sm:$0xff]
    %v108 = vld [vmem:[#allocation2 + $0x1a8] sm:$0xff]
    %v109 = vld [vmem:[#allocation2 + $0x1b0] sm:$0xff]
    %v110 = vld [vmem:[#allocation2 + $0x1b8] sm:$0xff]
    %v111 = vld [vmem:[#allocation2 + $0x1c0] sm:$0xff]
    %v112 = vld [vmem:[#allocation2 + $0x1c8] sm:$0xff]
    %v113 = vld [vmem:[#allocation2 + $0x1d0] sm:$0xff]
    %v114 = vld [vmem:[#allocation2 + $0x1d8] sm:$0xff]
    %v115 = vld [vmem:[#allocation2 + $0x1e0] sm:$0xff]
    %v116 = vld [vmem:[#allocation2 + $0x1e8] sm:$0xff]
    %v117 = vld [vmem:[#allocation2 + $0x1f0] sm:$0xff]
    %v118 = vld [vmem:[#allocation2 + $0x1f8] sm:$0xff]
    %v119 = vld [vmem:[#allocation2 + $0x200] sm:$0xff]
    %v120 = vld [vmem:[#allocation2 + $0x208] sm:$0xff]
    %v121 = vld [vmem:[#allocation2 + $0x210] sm:$0xff]
    %v122 = vld [vmem:[#allocation2 + $0x218] sm:$0xff]
    %v123 = vld [vmem:[#allocation2 + $0x220] sm:$0xff]
    %v124 = vld [vmem:[#allocation2 + $0x228] sm:$0xff]
    %v125 = vld [vmem:[#allocation2 + $0x230] sm:$0xff]
    %v126 = vld [vmem:[#allocation2 + $0x238] sm:$0xff]
    %v127 = vld [vmem:[#allocation2 + $0x240] sm:$0xff]
    %v128 = vld [vmem:[#allocation2 + $0x248] sm:$0xff]
    %v129 = vld [vmem:[#allocation2 + $0x250] sm:$0xff]
    %v130 = vld [vmem:[#allocation2 + $0x258] sm:$0xff]
    %v131 = vld [vmem:[#allocation2 + $0x260] sm:$0xff]
    %v132 = vld [vmem:[#allocation2 + $0x268] sm:$0xff]
    %v133 = vld [vmem:[#allocation2 + $0x270] sm:$0xff]
    %v134 = vld [vmem:[#allocation2 + $0x278] sm:$0xff]
    %v135 = vld [vmem:[#allocation2 + $0x280] sm:$0xff]
    %v136 = vld [vmem:[#allocation2 + $0x288] sm:$0xff]
    %v137 = vld [vmem:[#allocation2 + $0x290] sm:$0xff]
    %v138 = vld [vmem:[#allocation2 + $0x298] sm:$0xff]
    %v139 = vld [vmem:[#allocation2 + $0x2a0] sm:$0xff]
    %v140 = vld [vmem:[#allocation2 + $0x2a8] sm:$0xff]
    %v141 = vld [vmem:[#allocation2 + $0x2b0] sm:$0xff]
    %v142 = vld [vmem:[#allocation2 + $0x2b8] sm:$0xff]
    %v143 = vld [vmem:[#allocation2 + $0x2c0] sm:$0xff]
    %v144 = vld [vmem:[#allocation2 + $0x2c8] sm:$0xff]
    %v145 = vld [vmem:[#allocation2 + $0x2d0] sm:$0xff]
    %v146 = vld [vmem:[#allocation2 + $0x2d8] sm:$0xff]
    %v147 = vld [vmem:[#allocation2 + $0x2e0] sm:$0xff]
    %v148 = vld [vmem:[#allocation2 + $0x2e8] sm:$0xff]
    %v149 = vld [vmem:[#allocation2 + $0x2f0] sm:$0xff]
    %v150 = vld [vmem:[#allocation2 + $0x2f8] sm:$0xff]
    %v151 = vld [vmem:[#allocation2 + $0x300] sm:$0xff]
    %v152 = vld [vmem:[#allocation2 + $0x308] sm:$0xff]
    %v153 = vld [vmem:[#allocation2 + $0x310] sm:$0xff]
    %v154 = vld [vmem:[#allocation2 + $0x318] sm:$0xff]
    %v155 = vld [vmem:[#allocation2 + $0x320] sm:$0xff]
    %v156 = vld [vmem:[#allocation2 + $0x328] sm:$0xff]
    %v157 = vld [vmem:[#allocation2 + $0x330] sm:$0xff]
    %v158 = vld [vmem:[#allocation2 + $0x338] sm:$0xff]
    %v159 = vld [vmem:[#allocation2 + $0x340] sm:$0xff]
    %v160 = vld [vmem:[#allocation2 + $0x348] sm:$0xff]
    %v161 = vld [vmem:[#allocation2 + $0x350] sm:$0xff]
    %v162 = vld [vmem:[#allocation2 + $0x358] sm:$0xff]
    %v163 = vld [vmem:[#allocation2 + $0x360] sm:$0xff]
    %v164 = vld [vmem:[#allocation2 + $0x368] sm:$0xff]
    %v165 = vld [vmem:[#allocation2 + $0x370] sm:$0xff]
    %v166 = vld [vmem:[#allocation2 + $0x378] sm:$0xff]
    %v167 = vld [vmem:[#allocation2 + $0x380] sm:$0xff]
    %v168 = vld [vmem:[#allocation2 + $0x388] sm:$0xff]
    %v169 = vld [vmem:[#allocation2 + $0x390] sm:$0xff]
    %v170 = vld [vmem:[#allocation2 + $0x398] sm:$0xff]
    %v171 = vld [vmem:[#allocation2 + $0x3a0] sm:$0xff]
    %v172 = vld [vmem:[#allocation2 + $0x3a8] sm:$0xff]
    %v173 = vld [vmem:[#allocation2 + $0x3b0] sm:$0xff]
    %v174 = vld [vmem:[#allocation2 + $0x3b8] sm:$0xff]
    %v175 = vld [vmem:[#allocation2 + $0x3c0] sm:$0xff]
    %v176 = vld [vmem:[#allocation2 + $0x3c8] sm:$0xff]
    %v177 = vld [vmem:[#allocation2 + $0x3d0] sm:$0xff]
    %v178 = vld [vmem:[#allocation2 + $0x3d8] sm:$0xff]
    %v179 = vld [vmem:[#allocation2 + $0x3e0] sm:$0xff]
    %v180 = vld [vmem:[#allocation2 + $0x3e8] sm:$0xff]
    %v181 = vld [vmem:[#allocation2 + $0x3f0] sm:$0xff]
    %v182 = vld [vmem:[#allocation2 + $0x3f8] sm:$0xff]
    %v311 = vunpack.c.l.b16 %v55
    %v312 = vunpack.c.h.b16 %v55
    %v313 = vunpack.c.l.b16 %v56
    %v314 = vunpack.c.h.b16 %v56
    %v315 = vunpack.c.l.b16 %v57
    %v316 = vunpack.c.h.b16 %v57
    %v317 = vunpack.c.l.b16 %v58
    %v318 = vunpack.c.h.b16 %v58
    %v319 = vunpack.c.l.b16 %v59
    %v320 = vunpack.c.h.b16 %v59
    %v321 = vunpack.c.l.b16 %v60
    %v322 = vunpack.c.h.b16 %v60
    %v323 = vunpack.c.l.b16 %v61
    %v324 = vunpack.c.h.b16 %v61
    %v325 = vunpack.c.l.b16 %v62
    %v326 = vunpack.c.h.b16 %v62
    %v327 = vunpack.c.l.b16 %v63
    %v328 = vunpack.c.h.b16 %v63
    %v329 = vunpack.c.l.b16 %v64
    %v330 = vunpack.c.h.b16 %v64
    %v331 = vunpack.c.l.b16 %v65
    %v332 = vunpack.c.h.b16 %v65
    %v333 = vunpack.c.l.b16 %v66
    %v334 = vunpack.c.h.b16 %v66
    %v335 = vunpack.c.l.b16 %v67
    %v336 = vunpack.c.h.b16 %v67
    %v337 = vunpack.c.l.b16 %v68
    %v338 = vunpack.c.h.b16 %v68
    %v339 = vunpack.c.l.b16 %v69
    %v340 = vunpack.c.h.b16 %v69
    %v341 = vunpack.c.l.b16 %v70
    %v342 = vunpack.c.h.b16 %v70
    %v343 = vunpack.c.l.b16 %v71
    %v344 = vunpack.c.h.b16 %v71
    %v345 = vunpack.c.l.b16 %v72
    %v346 = vunpack.c.h.b16 %v72
    %v347 = vunpack.c.l.b16 %v73
    %v348 = vunpack.c.h.b16 %v73
    %v349 = vunpack.c.l.b16 %v74
    %v350 = vunpack.c.h.b16 %v74
    %v351 = vunpack.c.l.b16 %v75
    %v352 = vunpack.c.h.b16 %v75
    %v353 = vunpack.c.l.b16 %v76
    %v354 = vunpack.c.h.b16 %v76
    %v355 = vunpack.c.l.b16 %v77
    %v356 = vunpack.c.h.b16 %v77
    %v357 = vunpack.c.l.b16 %v78
    %v358 = vunpack.c.h.b16 %v78
    %v359 = vunpack.c.l.b16 %v79
    %v360 = vunpack.c.h.b16 %v79
    %v361 = vunpack.c.l.b16 %v80
    %v362 = vunpack.c.h.b16 %v80
    %v363 = vunpack.c.l.b16 %v81
    %v364 = vunpack.c.h.b16 %v81
    %v365 = vunpack.c.l.b16 %v82
    %v366 = vunpack.c.h.b16 %v82
    %v367 = vunpack.c.l.b16 %v83
    %v368 = vunpack.c.h.b16 %v83
    %v369 = vunpack.c.l.b16 %v84
    %v370 = vunpack.c.h.b16 %v84
    %v371 = vunpack.c.l.b16 %v85
    %v372 = vunpack.c.h.b16 %v85
    %v373 = vunpack.c.l.b16 %v86
    %v374 = vunpack.c.h.b16 %v86
    %v375 = vunpack.c.l.b16 %v87
    %v376 = vunpack.c.h.b16 %v87
    %v377 = vunpack.c.l.b16 %v88
    %v378 = vunpack.c.h.b16 %v88
    %v379 = vunpack.c.l.b16 %v89
    %v380 = vunpack.c.h.b16 %v89
    %v381 = vunpack.c.l.b16 %v90
    %v382 = vunpack.c.h.b16 %v90
    %v383 = vunpack.c.l.b16 %v91
    %v384 = vunpack.c.h.b16 %v91
    %v385 = vunpack.c.l.b16 %v92
    %v386 = vunpack.c.h.b16 %v92
    %v387 = vunpack.c.l.b16 %v93
    %v388 = vunpack.c.h.b16 %v93
    %v389 = vunpack.c.l.b16 %v94
    %v390 = vunpack.c.h.b16 %v94
    %v391 = vunpack.c.l.b16 %v95
    %v392 = vunpack.c.h.b16 %v95
    %v393 = vunpack.c.l.b16 %v96
    %v394 = vunpack.c.h.b16 %v96
    %v395 = vunpack.c.l.b16 %v97
    %v396 = vunpack.c.h.b16 %v97
    %v397 = vunpack.c.l.b16 %v98
    %v398 = vunpack.c.h.b16 %v98
    %v399 = vunpack.c.l.b16 %v99
    %v400 = vunpack.c.h.b16 %v99
    %v401 = vunpack.c.l.b16 %v100
    %v402 = vunpack.c.h.b16 %v100
    %v403 = vunpack.c.l.b16 %v101
    %v404 = vunpack.c.h.b16 %v101
    %v405 = vunpack.c.l.b16 %v102
    %v406 = vunpack.c.h.b16 %v102
    %v407 = vunpack.c.l.b16 %v103
    %v408 = vunpack.c.h.b16 %v103
    %v409 = vunpack.c.l.b16 %v104
    %v410 = vunpack.c.h.b16 %v104
    %v411 = vunpack.c.l.b16 %v105
    %v412 = vunpack.c.h.b16 %v105
    %v413 = vunpack.c.l.b16 %v106
    %v414 = vunpack.c.h.b16 %v106
    %v415 = vunpack.c.l.b16 %v107
    %v416 = vunpack.c.h.b16 %v107
    %v417 = vunpack.c.l.b16 %v108
    %v418 = vunpack.c.h.b16 %v108
    %v419 = vunpack.c.l.b16 %v109
    %v420 = vunpack.c.h.b16 %v109
    %v421 = vunpack.c.l.b16 %v110
    %v422 = vunpack.c.h.b16 %v110
    %v423 = vunpack.c.l.b16 %v111
    %v424 = vunpack.c.h.b16 %v111
    %v425 = vunpack.c.l.b16 %v112
    %v426 = vunpack.c.h.b16 %v112
    %v427 = vunpack.c.l.b16 %v113
    %v428 = vunpack.c.h.b16 %v113
    %v429 = vunpack.c.l.b16 %v114
    %v430 = vunpack.c.h.b16 %v114
    %v431 = vunpack.c.l.b16 %v115
    %v432 = vunpack.c.h.b16 %v115
    %v433 = vunpack.c.l.b16 %v116
    %v434 = vunpack.c.h.b16 %v116
    %v435 = vunpack.c.l.b16 %v117
    %v436 = vunpack.c.h.b16 %v117
    %v437 = vunpack.c.l.b16 %v118
    %v438 = vunpack.c.h.b16 %v118
    %v439 = vunpack.c.l.b16 %v119
    %v440 = vunpack.c.h.b16 %v119
    %v441 = vunpack.c.l.b16 %v120
    %v442 = vunpack.c.h.b16 %v120
    %v443 = vunpack.c.l.b16 %v121
    %v444 = vunpack.c.h.b16 %v121
    %v445 = vunpack.c.l.b16 %v122
    %v446 = vunpack.c.h.b16 %v122
    %v447 = vunpack.c.l.b16 %v123
    %v448 = vunpack.c.h.b16 %v123
    %v449 = vunpack.c.l.b16 %v124
    %v450 = vunpack.c.h.b16 %v124
    %v451 = vunpack.c.l.b16 %v125
    %v452 = vunpack.c.h.b16 %v125
    %v453 = vunpack.c.l.b16 %v126
    %v454 = vunpack.c.h.b16 %v126
    %v455 = vunpack.c.l.b16 %v127
    %v456 = vunpack.c.h.b16 %v127
    %v457 = vunpack.c.l.b16 %v128
    %v458 = vunpack.c.h.b16 %v128
    %v459 = vunpack.c.l.b16 %v129
    %v460 = vunpack.c.h.b16 %v129
    %v461 = vunpack.c.l.b16 %v130
    %v462 = vunpack.c.h.b16 %v130
    %v463 = vunpack.c.l.b16 %v131
    %v464 = vunpack.c.h.b16 %v131
    %v465 = vunpack.c.l.b16 %v132
    %v466 = vunpack.c.h.b16 %v132
    %v467 = vunpack.c.l.b16 %v133
    %v468 = vunpack.c.h.b16 %v133
    %v469 = vunpack.c.l.b16 %v134
    %v470 = vunpack.c.h.b16 %v134
    %v471 = vunpack.c.l.b16 %v135
    %v472 = vunpack.c.h.b16 %v135
    %v473 = vunpack.c.l.b16 %v136
    %v474 = vunpack.c.h.b16 %v136
    %v475 = vunpack.c.l.b16 %v137
    %v476 = vunpack.c.h.b16 %v137
    %v477 = vunpack.c.l.b16 %v138
    %v478 = vunpack.c.h.b16 %v138
    %v479 = vunpack.c.l.b16 %v139
    %v480 = vunpack.c.h.b16 %v139
    %v481 = vunpack.c.l.b16 %v140
    %v482 = vunpack.c.h.b16 %v140
    %v483 = vunpack.c.l.b16 %v141
    %v484 = vunpack.c.h.b16 %v141
    %v485 = vunpack.c.l.b16 %v142
    %v486 = vunpack.c.h.b16 %v142
    %v487 = vunpack.c.l.b16 %v143
    %v488 = vunpack.c.h.b16 %v143
    %v489 = vunpack.c.l.b16 %v144
    %v490 = vunpack.c.h.b16 %v144
    %v491 = vunpack.c.l.b16 %v145
    %v492 = vunpack.c.h.b16 %v145
    %v493 = vunpack.c.l.b16 %v146
    %v494 = vunpack.c.h.b16 %v146
    %v495 = vunpack.c.l.b16 %v147
    %v496 = vunpack.c.h.b16 %v147
    %v497 = vunpack.c.l.b16 %v148
    %v498 = vunpack.c.h.b16 %v148
    %v499 = vunpack.c.l.b16 %v149
    %v500 = vunpack.c.h.b16 %v149
    %v501 = vunpack.c.l.b16 %v150
    %v502 = vunpack.c.h.b16 %v150
    %v503 = vunpack.c.l.b16 %v151
    %v504 = vunpack.c.h.b16 %v151
    %v505 = vunpack.c.l.b16 %v152
    %v506 = vunpack.c.h.b16 %v152
    %v507 = vunpack.c.l.b16 %v153
    %v508 = vunpack.c.h.b16 %v153
    %v509 = vunpack.c.l.b16 %v154
    %v510 = vunpack.c.h.b16 %v154
    %v511 = vunpack.c.l.b16 %v155
    %v512 = vunpack.c.h.b16 %v155
    %v513 = vunpack.c.l.b16 %v156
    %v514 = vunpack.c.h.b16 %v156
    %v515 = vunpack.c.l.b16 %v157
    %v516 = vunpack.c.h.b16 %v157
    %v517 = vunpack.c.l.b16 %v158
    %v518 = vunpack.c.h.b16 %v158
    %v519 = vunpack.c.l.b16 %v159
    %v520 = vunpack.c.h.b16 %v159
    %v521 = vunpack.c.l.b16 %v160
    %v522 = vunpack.c.h.b16 %v160
    %v523 = vunpack.c.l.b16 %v161
    %v524 = vunpack.c.h.b16 %v161
    %v525 = vunpack.c.l.b16 %v162
    %v526 = vunpack.c.h.b16 %v162
    %v527 = vunpack.c.l.b16 %v163
    %v528 = vunpack.c.h.b16 %v163
    %v529 = vunpack.c.l.b16 %v164
    %v530 = vunpack.c.h.b16 %v164
    %v531 = vunpack.c.l.b16 %v165
    %v532 = vunpack.c.h.b16 %v165
    %v533 = vunpack.c.l.b16 %v166
    %v534 = vunpack.c.h.b16 %v166
    %v535 = vunpack.c.l.b16 %v167
    %v536 = vunpack.c.h.b16 %v167
    %v537 = vunpack.c.l.b16 %v168
    %v538 = vunpack.c.h.b16 %v168
    %v539 = vunpack.c.l.b16 %v169
    %v540 = vunpack.c.h.b16 %v169
    %v541 = vunpack.c.l.b16 %v170
    %v542 = vunpack.c.h.b16 %v170
    %v543 = vunpack.c.l.b16 %v171
    %v544 = vunpack.c.h.b16 %v171
    %v545 = vunpack.c.l.b16 %v172
    %v546 = vunpack.c.h.b16 %v172
    %v547 = vunpack.c.l.b16 %v173
    %v548 = vunpack.c.h.b16 %v173
    %v549 = vunpack.c.l.b16 %v174
    %v550 = vunpack.c.h.b16 %v174
    %v551 = vunpack.c.l.b16 %v175
    %v552 = vunpack.c.h.b16 %v175
    %v553 = vunpack.c.l.b16 %v176
    %v554 = vunpack.c.h.b16 %v176
    %v555 = vunpack.c.l.b16 %v177
    %v556 = vunpack.c.h.b16 %v177
    %v557 = vunpack.c.l.b16 %v178
    %v558 = vunpack.c.h.b16 %v178
    %v559 = vunpack.c.l.b16 %v179
    %v560 = vunpack.c.h.b16 %v179
    %v561 = vunpack.c.l.b16 %v180
    %v562 = vunpack.c.h.b16 %v180
    %v563 = vunpack.c.l.b16 %v181
    %v564 = vunpack.c.h.b16 %v181
    %v565 = vunpack.c.l.b16 %v182
    %v566 = vunpack.c.h.b16 %v182
    %v567 = vpack.c.b16 %v315, %v311
    %v568 = vpack.c.b16 %v316, %v312
    %v569 = vpack.c.b16 %v317, %v313
    %v570 = vpack.c.b16 %v318, %v314
    %v571 = vpack.c.b16 %v323, %v319
    %v572 = vpack.c.b16 %v324, %v320
    %v573 = vpack.c.b16 %v325, %v321
    %v574 = vpack.c.b16 %v326, %v322
    %v575 = vpack.c.b16 %v331, %v327
    %v576 = vpack.c.b16 %v332, %v328
    %v577 = vpack.c.b16 %v333, %v329
    %v578 = vpack.c.b16 %v334, %v330
    %v579 = vpack.c.b16 %v339, %v335
    %v580 = vpack.c.b16 %v340, %v336
    %v581 = vpack.c.b16 %v341, %v337
    %v582 = vpack.c.b16 %v342, %v338
    %v583 = vpack.c.b16 %v347, %v343
    %v584 = vpack.c.b16 %v348, %v344
    %v585 = vpack.c.b16 %v349, %v345
    %v586 = vpack.c.b16 %v350, %v346
    %v587 = vpack.c.b16 %v355, %v351
    %v588 = vpack.c.b16 %v356, %v352
    %v589 = vpack.c.b16 %v357, %v353
    %v590 = vpack.c.b16 %v358, %v354
    %v591 = vpack.c.b16 %v363, %v359
    %v592 = vpack.c.b16 %v364, %v360
    %v593 = vpack.c.b16 %v365, %v361
    %v594 = vpack.c.b16 %v366, %v362
    %v595 = vpack.c.b16 %v371, %v367
    %v596 = vpack.c.b16 %v372, %v368
    %v597 = vpack.c.b16 %v373, %v369
    %v598 = vpack.c.b16 %v374, %v370
    %v599 = vpack.c.b16 %v379, %v375
    %v600 = vpack.c.b16 %v380, %v376
    %v601 = vpack.c.b16 %v381, %v377
    %v602 = vpack.c.b16 %v382, %v378
    %v603 = vpack.c.b16 %v387, %v383
    %v604 = vpack.c.b16 %v388, %v384
    %v605 = vpack.c.b16 %v389, %v385
    %v606 = vpack.c.b16 %v390, %v386
    %v607 = vpack.c.b16 %v395, %v391
    %v608 = vpack.c.b16 %v396, %v392
    %v609 = vpack.c.b16 %v397, %v393
    %v610 = vpack.c.b16 %v398, %v394
    %v611 = vpack.c.b16 %v403, %v399
    %v612 = vpack.c.b16 %v404, %v400
    %v613 = vpack.c.b16 %v405, %v401
    %v614 = vpack.c.b16 %v406, %v402
    %v615 = vpack.c.b16 %v411, %v407
    %v616 = vpack.c.b16 %v412, %v408
    %v617 = vpack.c.b16 %v413, %v409
    %v618 = vpack.c.b16 %v414, %v410
    %v619 = vpack.c.b16 %v419, %v415
    %v620 = vpack.c.b16 %v420, %v416
    %v621 = vpack.c.b16 %v421, %v417
    %v622 = vpack.c.b16 %v422, %v418
    %v623 = vpack.c.b16 %v427, %v423
    %v624 = vpack.c.b16 %v428, %v424
    %v625 = vpack.c.b16 %v429, %v425
    %v626 = vpack.c.b16 %v430, %v426
    %v627 = vpack.c.b16 %v435, %v431
    %v628 = vpack.c.b16 %v436, %v432
    %v629 = vpack.c.b16 %v437, %v433
    %v630 = vpack.c.b16 %v438, %v434
    %v631 = vpack.c.b16 %v443, %v439
    %v632 = vpack.c.b16 %v444, %v440
    %v633 = vpack.c.b16 %v445, %v441
    %v634 = vpack.c.b16 %v446, %v442
    %v635 = vpack.c.b16 %v451, %v447
    %v636 = vpack.c.b16 %v452, %v448
    %v637 = vpack.c.b16 %v453, %v449
    %v638 = vpack.c.b16 %v454, %v450
    %v639 = vpack.c.b16 %v459, %v455
    %v640 = vpack.c.b16 %v460, %v456
    %v641 = vpack.c.b16 %v461, %v457
    %v642 = vpack.c.b16 %v462, %v458
    %v643 = vpack.c.b16 %v467, %v463
    %v644 = vpack.c.b16 %v468, %v464
    %v645 = vpack.c.b16 %v469, %v465
    %v646 = vpack.c.b16 %v470, %v466
    %v647 = vpack.c.b16 %v475, %v471
    %v648 = vpack.c.b16 %v476, %v472
    %v649 = vpack.c.b16 %v477, %v473
    %v650 = vpack.c.b16 %v478, %v474
    %v651 = vpack.c.b16 %v483, %v479
    %v652 = vpack.c.b16 %v484, %v480
    %v653 = vpack.c.b16 %v485, %v481
    %v654 = vpack.c.b16 %v486, %v482
    %v655 = vpack.c.b16 %v491, %v487
    %v656 = vpack.c.b16 %v492, %v488
    %v657 = vpack.c.b16 %v493, %v489
    %v658 = vpack.c.b16 %v494, %v490
    %v659 = vpack.c.b16 %v499, %v495
    %v660 = vpack.c.b16 %v500, %v496
    %v661 = vpack.c.b16 %v501, %v497
    %v662 = vpack.c.b16 %v502, %v498
    %v663 = vpack.c.b16 %v507, %v503
    %v664 = vpack.c.b16 %v508, %v504
    %v665 = vpack.c.b16 %v509, %v505
    %v666 = vpack.c.b16 %v510, %v506
    %v667 = vpack.c.b16 %v515, %v511
    %v668 = vpack.c.b16 %v516, %v512
    %v669 = vpack.c.b16 %v517, %v513
    %v670 = vpack.c.b16 %v518, %v514
    %v671 = vpack.c.b16 %v523, %v519
    %v672 = vpack.c.b16 %v524, %v520
    %v673 = vpack.c.b16 %v525, %v521
    %v674 = vpack.c.b16 %v526, %v522
    %v675 = vpack.c.b16 %v531, %v527
    %v676 = vpack.c.b16 %v532, %v528
    %v677 = vpack.c.b16 %v533, %v529
    %v678 = vpack.c.b16 %v534, %v530
    %v679 = vpack.c.b16 %v539, %v535
    %v680 = vpack.c.b16 %v540, %v536
    %v681 = vpack.c.b16 %v541, %v537
    %v682 = vpack.c.b16 %v542, %v538
    %v683 = vpack.c.b16 %v547, %v543
    %v684 = vpack.c.b16 %v548, %v544
    %v685 = vpack.c.b16 %v549, %v545
    %v686 = vpack.c.b16 %v550, %v546
    %v687 = vpack.c.b16 %v555, %v551
    %v688 = vpack.c.b16 %v556, %v552
    %v689 = vpack.c.b16 %v557, %v553
    %v690 = vpack.c.b16 %v558, %v554
    %v691 = vpack.c.b16 %v563, %v559
    %v692 = vpack.c.b16 %v564, %v560
    %v693 = vpack.c.b16 %v565, %v561
    %v694 = vpack.c.b16 %v566, %v562
    %823 = vmatprep.subr.bf16.mxu0 %v568
    %824 = vmatpush1.bf16.msra.mxu0 %v567
    %825 = vmatprep.subr.bf16.mxu0 %v572
    %826 = vmatpush1.bf16.msra.mxu0 %v571
    %827 = vmatprep.subr.bf16.mxu0 %v576
    %828 = vmatpush1.bf16.msra.mxu0 %v575
    %829 = vmatprep.subr.bf16.mxu0 %v580
    %830 = vmatpush1.bf16.msra.mxu0 %v579
    %831 = vmatprep.subr.bf16.mxu0 %v584
    %832 = vmatpush1.bf16.msra.mxu0 %v583
    %833 = vmatprep.subr.bf16.mxu0 %v588
    %834 = vmatpush1.bf16.msra.mxu0 %v587
    %835 = vmatprep.subr.bf16.mxu0 %v592
    %836 = vmatpush1.bf16.msra.mxu0 %v591
    %837 = vmatprep.subr.bf16.mxu0 %v596
    %838 = vmatpush1.bf16.msra.mxu0 %v595
    %839 = vmatprep.subr.bf16.mxu0 %v600
    %840 = vmatpush1.bf16.msra.mxu0 %v599
    %841 = vmatprep.subr.bf16.mxu0 %v604
    %842 = vmatpush1.bf16.msra.mxu0 %v603
    %843 = vmatprep.subr.bf16.mxu0 %v608
    %844 = vmatpush1.bf16.msra.mxu0 %v607
    %845 = vmatprep.subr.bf16.mxu0 %v612
    %846 = vmatpush1.bf16.msra.mxu0 %v611
    %847 = vmatprep.subr.bf16.mxu0 %v616
    %848 = vmatpush1.bf16.msra.mxu0 %v615
    %849 = vmatprep.subr.bf16.mxu0 %v620
    %850 = vmatpush1.bf16.msra.mxu0 %v619
    %851 = vmatprep.subr.bf16.mxu0 %v624
    %852 = vmatpush1.bf16.msra.mxu0 %v623
    %853 = vmatprep.subr.bf16.mxu0 %v628
    %854 = vmatpush1.bf16.msra.mxu0 %v627
    %855 = vmatprep.mubr.bf16.mxu0 %v52
    %856 = vmatmul.mubr.bf16.gmra.mrb[0].mxu0 %v51
    %v857 = vpop.f32.mrb[0].mxu0
    %v858 = vadd.f32 0.0, %v857
    %v859 = vpop.f32.mrb[0].mxu0
    %v860 = vadd.f32 0.0, %v859
    %v861 = vpop.f32.mrb[0].mxu0
    %v862 = vpop.f32.mrb[0].mxu0
    %863 = vdwg.mxu0
    %864 = vmatprep.subr.bf16.mxu0 %v632
    %865 = vmatpush1.bf16.msra.mxu0 %v631
    %866 = vmatprep.subr.bf16.mxu0 %v636
    %867 = vmatpush1.bf16.msra.mxu0 %v635
    %868 = vmatprep.subr.bf16.mxu0 %v640
    %869 = vmatpush1.bf16.msra.mxu0 %v639
    %870 = vmatprep.subr.bf16.mxu0 %v644
    %871 = vmatpush1.bf16.msra.mxu0 %v643
    %872 = vmatprep.subr.bf16.mxu0 %v648
    %873 = vmatpush1.bf16.msra.mxu0 %v647
    %874 = vmatprep.subr.bf16.mxu0 %v652
    %875 = vmatpush1.bf16.msra.mxu0 %v651
    %876 = vmatprep.subr.bf16.mxu0 %v656
    %877 = vmatpush1.bf16.msra.mxu0 %v655
    %878 = vmatprep.subr.bf16.mxu0 %v660
    %879 = vmatpush1.bf16.msra.mxu0 %v659
    %880 = vmatprep.subr.bf16.mxu0 %v664
    %881 = vmatpush1.bf16.msra.mxu0 %v663
    %882 = vmatprep.subr.bf16.mxu0 %v668
    %883 = vmatpush1.bf16.msra.mxu0 %v667
    %884 = vmatprep.subr.bf16.mxu0 %v672
    %885 = vmatpush1.bf16.msra.mxu0 %v671
    %886 = vmatprep.subr.bf16.mxu0 %v676
    %887 = vmatpush1.bf16.msra.mxu0 %v675
    %888 = vmatprep.subr.bf16.mxu0 %v680
    %889 = vmatpush1.bf16.msra.mxu0 %v679
    %890 = vmatprep.subr.bf16.mxu0 %v684
    %891 = vmatpush1.bf16.msra.mxu0 %v683
    %892 = vmatprep.subr.bf16.mxu0 %v688
    %893 = vmatpush1.bf16.msra.mxu0 %v687
    %894 = vmatprep.subr.bf16.mxu0 %v692
    %895 = vmatpush1.bf16.msra.mxu0 %v691
    %896 = vmatprep.mubr.bf16.mxu0 %v54
    %897 = vmatmul.mubr.bf16.gmra.mrb[0].mxu0 %v53
    %v898 = vpop.f32.mrb[0].mxu0
    %v899 = vadd.f32 %v858, %v898
    %v900 = vpop.f32.mrb[0].mxu0
    %v901 = vadd.f32 %v860, %v900
    %v902 = vpop.f32.mrb[0].mxu0
    %v903 = vpop.f32.mrb[0].mxu0
    %904 = vdwg.mxu0
    %905 = vmatprep.subr.bf16.mxu0 %v570
    %906 = vmatpush1.bf16.msra.mxu0 %v569
    %907 = vmatprep.subr.bf16.mxu0 %v574
    %908 = vmatpush1.bf16.msra.mxu0 %v573
    %909 = vmatprep.subr.bf16.mxu0 %v578
    %910 = vmatpush1.bf16.msra.mxu0 %v577
    %911 = vmatprep.subr.bf16.mxu0 %v582
    %912 = vmatpush1.bf16.msra.mxu0 %v581
    %913 = vmatprep.subr.bf16.mxu0 %v586
    %914 = vmatpush1.bf16.msra.mxu0 %v585
    %915 = vmatprep.subr.bf16.mxu0 %v590
    %916 = vmatpush1.bf16.msra.mxu0 %v589
    %917 = vmatprep.subr.bf16.mxu0 %v594
    %918 = vmatpush1.bf16.msra.mxu0 %v593
    %919 = vmatprep.subr.bf16.mxu0 %v598
    %920 = vmatpush1.bf16.msra.mxu0 %v597
    %921 = vmatprep.subr.bf16.mxu0 %v602
    %922 = vmatpush1.bf16.msra.mxu0 %v601
    %923 = vmatprep.subr.bf16.mxu0 %v606
    %924 = vmatpush1.bf16.msra.mxu0 %v605
    %925 = vmatprep.subr.bf16.mxu0 %v610
    %926 = vmatpush1.bf16.msra.mxu0 %v609
    %927 = vmatprep.subr.bf16.mxu0 %v614
    %928 = vmatpush1.bf16.msra.mxu0 %v613
    %929 = vmatprep.subr.bf16.mxu0 %v618
    %930 = vmatpush1.bf16.msra.mxu0 %v617
    %931 = vmatprep.subr.bf16.mxu0 %v622
    %932 = vmatpush1.bf16.msra.mxu0 %v621
    %933 = vmatprep.subr.bf16.mxu0 %v626
    %934 = vmatpush1.bf16.msra.mxu0 %v625
    %935 = vmatprep.subr.bf16.mxu0 %v630
    %936 = vmatpush1.bf16.msra.mxu0 %v629
    %937 = vmatprep.mubr.bf16.mxu0 %v52
    %938 = vmatmul.mubr.bf16.gmra.mrb[0].mxu0 %v51
    %v939 = vpop.f32.mrb[0].mxu0
    %v940 = vadd.f32 0.0, %v939
    %v941 = vpop.f32.mrb[0].mxu0
    %v942 = vadd.f32 0.0, %v941
    %v943 = vpop.f32.mrb[0].mxu0
    %v944 = vpop.f32.mrb[0].mxu0
    %945 = vdwg.mxu0
    %946 = vmatprep.subr.bf16.mxu0 %v634
    %947 = vmatpush1.bf16.msra.mxu0 %v633
    %948 = vmatprep.subr.bf16.mxu0 %v638
    %949 = vmatpush1.bf16.msra.mxu0 %v637
    %950 = vmatprep.subr.bf16.mxu0 %v642
    %951 = vmatpush1.bf16.msra.mxu0 %v641
    %952 = vmatprep.subr.bf16.mxu0 %v646
    %953 = vmatpush1.bf16.msra.mxu0 %v645
    %954 = vmatprep.subr.bf16.mxu0 %v650
    %955 = vmatpush1.bf16.msra.mxu0 %v649
    %956 = vmatprep.subr.bf16.mxu0 %v654
    %957 = vmatpush1.bf16.msra.mxu0 %v653
    %958 = vmatprep.subr.bf16.mxu0 %v658
    %959 = vmatpush1.bf16.msra.mxu0 %v657
    %960 = vmatprep.subr.bf16.mxu0 %v662
    %961 = vmatpush1.bf16.msra.mxu0 %v661
    %962 = vmatprep.subr.bf16.mxu0 %v666
    %963 = vmatpush1.bf16.msra.mxu0 %v665
    %964 = vmatprep.subr.bf16.mxu0 %v670
    %965 = vmatpush1.bf16.msra.mxu0 %v669
    %966 = vmatprep.subr.bf16.mxu0 %v674
    %967 = vmatpush1.bf16.msra.mxu0 %v673
    %968 = vmatprep.subr.bf16.mxu0 %v678
    %969 = vmatpush1.bf16.msra.mxu0 %v677
    %970 = vmatprep.subr.bf16.mxu0 %v682
    %971 = vmatpush1.bf16.msra.mxu0 %v681
    %972 = vmatprep.subr.bf16.mxu0 %v686
    %973 = vmatpush1.bf16.msra.mxu0 %v685
    %974 = vmatprep.subr.bf16.mxu0 %v690
    %975 = vmatpush1.bf16.msra.mxu0 %v689
    %976 = vmatprep.subr.bf16.mxu0 %v694
    %977 = vmatpush1.bf16.msra.mxu0 %v693
    %978 = vmatprep.mubr.bf16.mxu0 %v54
    %979 = vmatmul.mubr.bf16.gmra.mrb[0].mxu0 %v53
    %v980 = vpop.f32.mrb[0].mxu0
    %v981 = vadd.f32 %v940, %v980
    %v982 = vpop.f32.mrb[0].mxu0
    %v983 = vadd.f32 %v942, %v982
    %v984 = vpop.f32.mrb[0].mxu0
    %v985 = vpop.f32.mrb[0].mxu0
    %986 = vdwg.mxu0
    %v989 = vlaneseq
    %v990 = vshrl.u32 %v989, 7
    %v991 = vsub.s32 0, %v990
    %v992 = vrot.slane %v44, %v991
    %v993 = vlaneseq
    %v994 = vshrl.u32 %v993, 7
    %v995 = vsub.s32 4, %v994
    %v996 = vrot.slane %v44, %v995
    %v997 = vlaneseq
    %v998 = vshrl.u32 %v997, 7
    %v999 = vsub.s32 0, %v998
    %v1000 = vrot.slane %v45, %v999
    %v1001 = vlaneseq
    %v1002 = vshrl.u32 %v1001, 7
    %v1003 = vsub.s32 4, %v1002
    %v1004 = vrot.slane %v45, %v1003
    %v1009 = vlaneseq
    %v1010 = vshrl.u32 %v1009, 7
    %v1011 = vsub.s32 0, %v1010
    %v1012 = vrot.slane %v992, %v1011
    %v1013 = vlaneseq
    %v1014 = vshrl.u32 %v1013, 7
    %v1015 = vsub.s32 0, %v1014
    %v1016 = vrot.slane %v996, %v1015
    %v1017 = vlaneseq
    %v1018 = vshrl.u32 %v1017, 7
    %v1019 = vsub.s32 0, %v1018
    %v1020 = vrot.slane %v1000, %v1019
    %v1021 = vlaneseq
    %v1022 = vshrl.u32 %v1021, 7
    %v1023 = vsub.s32 0, %v1022
    %v1024 = vrot.slane %v1004, %v1023
    %v1025 = vmul.f32 %v899, %v1012
    %v1026 = vmul.f32 %v901, %v1016
    %v1027 = vmul.f32 %v981, %v1020
    %v1028 = vmul.f32 %v983, %v1024
    %v1029 = vlaneseq
    %v1030 = vshrl.u32 %v1029, 7
    %v1031 = vsub.s32 2, %v1030
    %v1032 = vrot.slane %v44, %v1031
    %v1033 = vlaneseq
    %v1034 = vshrl.u32 %v1033, 7
    %v1035 = vsub.s32 6, %v1034
    %v1036 = vrot.slane %v44, %v1035
    %v1037 = vlaneseq
    %v1038 = vshrl.u32 %v1037, 7
    %v1039 = vsub.s32 2, %v1038
    %v1040 = vrot.slane %v45, %v1039
    %v1041 = vlaneseq
    %v1042 = vshrl.u32 %v1041, 7
    %v1043 = vsub.s32 6, %v1042
    %v1044 = vrot.slane %v45, %v1043
    %v1049 = vlaneseq
    %v1050 = vshrl.u32 %v1049, 7
    %v1051 = vsub.s32 2, %v1050
    %v1052 = vrot.slane %v1032, %v1051
    %v1053 = vlaneseq
    %v1054 = vshrl.u32 %v1053, 7
    %v1055 = vsub.s32 2, %v1054
    %v1056 = vrot.slane %v1036, %v1055
    %v1057 = vlaneseq
    %v1058 = vshrl.u32 %v1057, 7
    %v1059 = vsub.s32 2, %v1058
    %v1060 = vrot.slane %v1040, %v1059
    %v1061 = vlaneseq
    %v1062 = vshrl.u32 %v1061, 7
    %v1063 = vsub.s32 2, %v1062
    %v1064 = vrot.slane %v1044, %v1063
    %v1065 = vadd.f32 %v1025, %v1052
    %v1066 = vadd.f32 %v1026, %v1056
    %v1067 = vadd.f32 %v1027, %v1060
    %v1068 = vadd.f32 %v1028, %v1064
    %vm1069 = vcmp.gt.f32.partialorder %v1065, 0.0
    %vm1070 = vcmp.gt.f32.partialorder %v1066, 0.0
    %vm1071 = vcmp.gt.f32.partialorder %v1067, 0.0
    %vm1072 = vcmp.gt.f32.partialorder %v1068, 0.0
    %v1073 = vmul.f32 %v1065, 0.01
    %v1074 = vmul.f32 %v1066, 0.01
    %v1075 = vmul.f32 %v1067, 0.01
    %v1076 = vmul.f32 %v1068, 0.01
    %v1077 = vsel %vm1069, %v1065, %v1073
    %v1078 = vsel %vm1070, %v1066, %v1074
    %v1079 = vsel %vm1071, %v1067, %v1075
    %v1080 = vsel %vm1072, %v1068, %v1076
    %v1081 = vpack.c.bf16 %v1077, %v1077
    %v1082 = vpack.c.bf16 %v1078, %v1078
    %v1083 = vpack.c.bf16 %v1079, %v1079
    %v1084 = vpack.c.bf16 %v1080, %v1080
    %s1085 = scalar_lea.vmem [#allocation2], 1024
    %v1086 = vld [vmem:[%s1085] sm:$0xff]
    %v1087 = vld [vmem:[%s1085 + $0x8] sm:$0xff]
    %v1088 = vld [vmem:[%s1085 + $0x10] sm:$0xff]
    %v1089 = vld [vmem:[%s1085 + $0x18] sm:$0xff]
    %v1090 = vld [vmem:[%s1085 + $0x20] sm:$0xff]
    %v1091 = vld [vmem:[%s1085 + $0x28] sm:$0xff]
    %v1092 = vld [vmem:[%s1085 + $0x30] sm:$0xff]
    %v1093 = vld [vmem:[%s1085 + $0x38] sm:$0xff]
    %v1094 = vld [vmem:[%s1085 + $0x40] sm:$0xff]
    %v1095 = vld [vmem:[%s1085 + $0x48] sm:$0xff]
    %v1096 = vld [vmem:[%s1085 + $0x50] sm:$0xff]
    %v1097 = vld [vmem:[%s1085 + $0x58] sm:$0xff]
    %v1098 = vld [vmem:[%s1085 + $0x60] sm:$0xff]
    %v1099 = vld [vmem:[%s1085 + $0x68] sm:$0xff]
    %v1100 = vld [vmem:[%s1085 + $0x70] sm:$0xff]
    %v1101 = vld [vmem:[%s1085 + $0x78] sm:$0xff]
    %v1102 = vld [vmem:[%s1085 + $0x80] sm:$0xff]
    %v1103 = vld [vmem:[%s1085 + $0x88] sm:$0xff]
    %v1104 = vld [vmem:[%s1085 + $0x90] sm:$0xff]
    %v1105 = vld [vmem:[%s1085 + $0x98] sm:$0xff]
    %v1106 = vld [vmem:[%s1085 + $0xa0] sm:$0xff]
    %v1107 = vld [vmem:[%s1085 + $0xa8] sm:$0xff]
    %v1108 = vld [vmem:[%s1085 + $0xb0] sm:$0xff]
    %v1109 = vld [vmem:[%s1085 + $0xb8] sm:$0xff]
    %v1110 = vld [vmem:[%s1085 + $0xc0] sm:$0xff]
    %v1111 = vld [vmem:[%s1085 + $0xc8] sm:$0xff]
    %v1112 = vld [vmem:[%s1085 + $0xd0] sm:$0xff]
    %v1113 = vld [vmem:[%s1085 + $0xd8] sm:$0xff]
    %v1114 = vld [vmem:[%s1085 + $0xe0] sm:$0xff]
    %v1115 = vld [vmem:[%s1085 + $0xe8] sm:$0xff]
    %v1116 = vld [vmem:[%s1085 + $0xf0] sm:$0xff]
    %v1117 = vld [vmem:[%s1085 + $0xf8] sm:$0xff]
    %v1118 = vld [vmem:[%s1085 + $0x100] sm:$0xff]
    %v1119 = vld [vmem:[%s1085 + $0x108] sm:$0xff]
    %v1120 = vld [vmem:[%s1085 + $0x110] sm:$0xff]
    %v1121 = vld [vmem:[%s1085 + $0x118] sm:$0xff]
    %v1122 = vld [vmem:[%s1085 + $0x120] sm:$0xff]
    %v1123 = vld [vmem:[%s1085 + $0x128] sm:$0xff]
    %v1124 = vld [vmem:[%s1085 + $0x130] sm:$0xff]
    %v1125 = vld [vmem:[%s1085 + $0x138] sm:$0xff]
    %v1126 = vld [vmem:[%s1085 + $0x140] sm:$0xff]
    %v1127 = vld [vmem:[%s1085 + $0x148] sm:$0xff]
    %v1128 = vld [vmem:[%s1085 + $0x150] sm:$0xff]
    %v1129 = vld [vmem:[%s1085 + $0x158] sm:$0xff]
    %v1130 = vld [vmem:[%s1085 + $0x160] sm:$0xff]
    %v1131 = vld [vmem:[%s1085 + $0x168] sm:$0xff]
    %v1132 = vld [vmem:[%s1085 + $0x170] sm:$0xff]
    %v1133 = vld [vmem:[%s1085 + $0x178] sm:$0xff]
    %v1134 = vld [vmem:[%s1085 + $0x180] sm:$0xff]
    %v1135 = vld [vmem:[%s1085 + $0x188] sm:$0xff]
    %v1136 = vld [vmem:[%s1085 + $0x190] sm:$0xff]
    %v1137 = vld [vmem:[%s1085 + $0x198] sm:$0xff]
    %v1138 = vld [vmem:[%s1085 + $0x1a0] sm:$0xff]
    %v1139 = vld [vmem:[%s1085 + $0x1a8] sm:$0xff]
    %v1140 = vld [vmem:[%s1085 + $0x1b0] sm:$0xff]
    %v1141 = vld [vmem:[%s1085 + $0x1b8] sm:$0xff]
    %v1142 = vld [vmem:[%s1085 + $0x1c0] sm:$0xff]
    %v1143 = vld [vmem:[%s1085 + $0x1c8] sm:$0xff]
    %v1144 = vld [vmem:[%s1085 + $0x1d0] sm:$0xff]
    %v1145 = vld [vmem:[%s1085 + $0x1d8] sm:$0xff]
    %v1146 = vld [vmem:[%s1085 + $0x1e0] sm:$0xff]
    %v1147 = vld [vmem:[%s1085 + $0x1e8] sm:$0xff]
    %v1148 = vld [vmem:[%s1085 + $0x1f0] sm:$0xff]
    %v1149 = vld [vmem:[%s1085 + $0x1f8] sm:$0xff]
    %v1150 = vld [vmem:[%s1085 + $0x200] sm:$0xff]
    %v1151 = vld [vmem:[%s1085 + $0x208] sm:$0xff]
    %v1152 = vld [vmem:[%s1085 + $0x210] sm:$0xff]
    %v1153 = vld [vmem:[%s1085 + $0x218] sm:$0xff]
    %v1154 = vld [vmem:[%s1085 + $0x220] sm:$0xff]
    %v1155 = vld [vmem:[%s1085 + $0x228] sm:$0xff]
    %v1156 = vld [vmem:[%s1085 + $0x230] sm:$0xff]
    %v1157 = vld [vmem:[%s1085 + $0x238] sm:$0xff]
    %v1158 = vld [vmem:[%s1085 + $0x240] sm:$0xff]
    %v1159 = vld [vmem:[%s1085 + $0x248] sm:$0xff]
    %v1160 = vld [vmem:[%s1085 + $0x250] sm:$0xff]
    %v1161 = vld [vmem:[%s1085 + $0x258] sm:$0xff]
    %v1162 = vld [vmem:[%s1085 + $0x260] sm:$0xff]
    %v1163 = vld [vmem:[%s1085 + $0x268] sm:$0xff]
    %v1164 = vld [vmem:[%s1085 + $0x270] sm:$0xff]
    %v1165 = vld [vmem:[%s1085 + $0x278] sm:$0xff]
    %v1166 = vld [vmem:[%s1085 + $0x280] sm:$0xff]
    %v1167 = vld [vmem:[%s1085 + $0x288] sm:$0xff]
    %v1168 = vld [vmem:[%s1085 + $0x290] sm:$0xff]
    %v1169 = vld [vmem:[%s1085 + $0x298] sm:$0xff]
    %v1170 = vld [vmem:[%s1085 + $0x2a0] sm:$0xff]
    %v1171 = vld [vmem:[%s1085 + $0x2a8] sm:$0xff]
    %v1172 = vld [vmem:[%s1085 + $0x2b0] sm:$0xff]
    %v1173 = vld [vmem:[%s1085 + $0x2b8] sm:$0xff]
    %v1174 = vld [vmem:[%s1085 + $0x2c0] sm:$0xff]
    %v1175 = vld [vmem:[%s1085 + $0x2c8] sm:$0xff]
    %v1176 = vld [vmem:[%s1085 + $0x2d0] sm:$0xff]
    %v1177 = vld [vmem:[%s1085 + $0x2d8] sm:$0xff]
    %v1178 = vld [vmem:[%s1085 + $0x2e0] sm:$0xff]
    %v1179 = vld [vmem:[%s1085 + $0x2e8] sm:$0xff]
    %v1180 = vld [vmem:[%s1085 + $0x2f0] sm:$0xff]
    %v1181 = vld [vmem:[%s1085 + $0x2f8] sm:$0xff]
    %v1182 = vld [vmem:[%s1085 + $0x300] sm:$0xff]
    %v1183 = vld [vmem:[%s1085 + $0x308] sm:$0xff]
    %v1184 = vld [vmem:[%s1085 + $0x310] sm:$0xff]
    %v1185 = vld [vmem:[%s1085 + $0x318] sm:$0xff]
    %v1186 = vld [vmem:[%s1085 + $0x320] sm:$0xff]
    %v1187 = vld [vmem:[%s1085 + $0x328] sm:$0xff]
    %v1188 = vld [vmem:[%s1085 + $0x330] sm:$0xff]
    %v1189 = vld [vmem:[%s1085 + $0x338] sm:$0xff]
    %v1190 = vld [vmem:[%s1085 + $0x340] sm:$0xff]
    %v1191 = vld [vmem:[%s1085 + $0x348] sm:$0xff]
    %v1192 = vld [vmem:[%s1085 + $0x350] sm:$0xff]
    %v1193 = vld [vmem:[%s1085 + $0x358] sm:$0xff]
    %v1194 = vld [vmem:[%s1085 + $0x360] sm:$0xff]
    %v1195 = vld [vmem:[%s1085 + $0x368] sm:$0xff]
    %v1196 = vld [vmem:[%s1085 + $0x370] sm:$0xff]
    %v1197 = vld [vmem:[%s1085 + $0x378] sm:$0xff]
    %v1198 = vld [vmem:[%s1085 + $0x380] sm:$0xff]
    %v1199 = vld [vmem:[%s1085 + $0x388] sm:$0xff]
    %v1200 = vld [vmem:[%s1085 + $0x390] sm:$0xff]
    %v1201 = vld [vmem:[%s1085 + $0x398] sm:$0xff]
    %v1202 = vld [vmem:[%s1085 + $0x3a0] sm:$0xff]
    %v1203 = vld [vmem:[%s1085 + $0x3a8] sm:$0xff]
    %v1204 = vld [vmem:[%s1085 + $0x3b0] sm:$0xff]
    %v1205 = vld [vmem:[%s1085 + $0x3b8] sm:$0xff]
    %v1206 = vld [vmem:[%s1085 + $0x3c0] sm:$0xff]
    %v1207 = vld [vmem:[%s1085 + $0x3c8] sm:$0xff]
    %v1208 = vld [vmem:[%s1085 + $0x3d0] sm:$0xff]
    %v1209 = vld [vmem:[%s1085 + $0x3d8] sm:$0xff]
    %v1210 = vld [vmem:[%s1085 + $0x3e0] sm:$0xff]
    %v1211 = vld [vmem:[%s1085 + $0x3e8] sm:$0xff]
    %v1212 = vld [vmem:[%s1085 + $0x3f0] sm:$0xff]
    %v1213 = vld [vmem:[%s1085 + $0x3f8] sm:$0xff]
    %v1342 = vunpack.c.l.b16 %v1086
    %v1343 = vunpack.c.h.b16 %v1086
    %v1344 = vunpack.c.l.b16 %v1087
    %v1345 = vunpack.c.h.b16 %v1087
    %v1346 = vunpack.c.l.b16 %v1088
    %v1347 = vunpack.c.h.b16 %v1088
    %v1348 = vunpack.c.l.b16 %v1089
    %v1349 = vunpack.c.h.b16 %v1089
    %v1350 = vunpack.c.l.b16 %v1090
    %v1351 = vunpack.c.h.b16 %v1090
    %v1352 = vunpack.c.l.b16 %v1091
    %v1353 = vunpack.c.h.b16 %v1091
    %v1354 = vunpack.c.l.b16 %v1092
    %v1355 = vunpack.c.h.b16 %v1092
    %v1356 = vunpack.c.l.b16 %v1093
    %v1357 = vunpack.c.h.b16 %v1093
    %v1358 = vunpack.c.l.b16 %v1094
    %v1359 = vunpack.c.h.b16 %v1094
    %v1360 = vunpack.c.l.b16 %v1095
    %v1361 = vunpack.c.h.b16 %v1095
    %v1362 = vunpack.c.l.b16 %v1096
    %v1363 = vunpack.c.h.b16 %v1096
    %v1364 = vunpack.c.l.b16 %v1097
    %v1365 = vunpack.c.h.b16 %v1097
    %v1366 = vunpack.c.l.b16 %v1098
    %v1367 = vunpack.c.h.b16 %v1098
    %v1368 = vunpack.c.l.b16 %v1099
    %v1369 = vunpack.c.h.b16 %v1099
    %v1370 = vunpack.c.l.b16 %v1100
    %v1371 = vunpack.c.h.b16 %v1100
    %v1372 = vunpack.c.l.b16 %v1101
    %v1373 = vunpack.c.h.b16 %v1101
    %v1374 = vunpack.c.l.b16 %v1102
    %v1375 = vunpack.c.h.b16 %v1102
    %v1376 = vunpack.c.l.b16 %v1103
    %v1377 = vunpack.c.h.b16 %v1103
    %v1378 = vunpack.c.l.b16 %v1104
    %v1379 = vunpack.c.h.b16 %v1104
    %v1380 = vunpack.c.l.b16 %v1105
    %v1381 = vunpack.c.h.b16 %v1105
    %v1382 = vunpack.c.l.b16 %v1106
    %v1383 = vunpack.c.h.b16 %v1106
    %v1384 = vunpack.c.l.b16 %v1107
    %v1385 = vunpack.c.h.b16 %v1107
    %v1386 = vunpack.c.l.b16 %v1108
    %v1387 = vunpack.c.h.b16 %v1108
    %v1388 = vunpack.c.l.b16 %v1109
    %v1389 = vunpack.c.h.b16 %v1109
    %v1390 = vunpack.c.l.b16 %v1110
    %v1391 = vunpack.c.h.b16 %v1110
    %v1392 = vunpack.c.l.b16 %v1111
    %v1393 = vunpack.c.h.b16 %v1111
    %v1394 = vunpack.c.l.b16 %v1112
    %v1395 = vunpack.c.h.b16 %v1112
    %v1396 = vunpack.c.l.b16 %v1113
    %v1397 = vunpack.c.h.b16 %v1113
    %v1398 = vunpack.c.l.b16 %v1114
    %v1399 = vunpack.c.h.b16 %v1114
    %v1400 = vunpack.c.l.b16 %v1115
    %v1401 = vunpack.c.h.b16 %v1115
    %v1402 = vunpack.c.l.b16 %v1116
    %v1403 = vunpack.c.h.b16 %v1116
    %v1404 = vunpack.c.l.b16 %v1117
    %v1405 = vunpack.c.h.b16 %v1117
    %v1406 = vunpack.c.l.b16 %v1118
    %v1407 = vunpack.c.h.b16 %v1118
    %v1408 = vunpack.c.l.b16 %v1119
    %v1409 = vunpack.c.h.b16 %v1119
    %v1410 = vunpack.c.l.b16 %v1120
    %v1411 = vunpack.c.h.b16 %v1120
    %v1412 = vunpack.c.l.b16 %v1121
    %v1413 = vunpack.c.h.b16 %v1121
    %v1414 = vunpack.c.l.b16 %v1122
    %v1415 = vunpack.c.h.b16 %v1122
    %v1416 = vunpack.c.l.b16 %v1123
    %v1417 = vunpack.c.h.b16 %v1123
    %v1418 = vunpack.c.l.b16 %v1124
    %v1419 = vunpack.c.h.b16 %v1124
    %v1420 = vunpack.c.l.b16 %v1125
    %v1421 = vunpack.c.h.b16 %v1125
    %v1422 = vunpack.c.l.b16 %v1126
    %v1423 = vunpack.c.h.b16 %v1126
    %v1424 = vunpack.c.l.b16 %v1127
    %v1425 = vunpack.c.h.b16 %v1127
    %v1426 = vunpack.c.l.b16 %v1128
    %v1427 = vunpack.c.h.b16 %v1128
    %v1428 = vunpack.c.l.b16 %v1129
    %v1429 = vunpack.c.h.b16 %v1129
    %v1430 = vunpack.c.l.b16 %v1130
    %v1431 = vunpack.c.h.b16 %v1130
    %v1432 = vunpack.c.l.b16 %v1131
    %v1433 = vunpack.c.h.b16 %v1131
    %v1434 = vunpack.c.l.b16 %v1132
    %v1435 = vunpack.c.h.b16 %v1132
    %v1436 = vunpack.c.l.b16 %v1133
    %v1437 = vunpack.c.h.b16 %v1133
    %v1438 = vunpack.c.l.b16 %v1134
    %v1439 = vunpack.c.h.b16 %v1134
    %v1440 = vunpack.c.l.b16 %v1135
    %v1441 = vunpack.c.h.b16 %v1135
    %v1442 = vunpack.c.l.b16 %v1136
    %v1443 = vunpack.c.h.b16 %v1136
    %v1444 = vunpack.c.l.b16 %v1137
    %v1445 = vunpack.c.h.b16 %v1137
    %v1446 = vunpack.c.l.b16 %v1138
    %v1447 = vunpack.c.h.b16 %v1138
    %v1448 = vunpack.c.l.b16 %v1139
    %v1449 = vunpack.c.h.b16 %v1139
    %v1450 = vunpack.c.l.b16 %v1140
    %v1451 = vunpack.c.h.b16 %v1140
    %v1452 = vunpack.c.l.b16 %v1141
    %v1453 = vunpack.c.h.b16 %v1141
    %v1454 = vunpack.c.l.b16 %v1142
    %v1455 = vunpack.c.h.b16 %v1142
    %v1456 = vunpack.c.l.b16 %v1143
    %v1457 = vunpack.c.h.b16 %v1143
    %v1458 = vunpack.c.l.b16 %v1144
    %v1459 = vunpack.c.h.b16 %v1144
    %v1460 = vunpack.c.l.b16 %v1145
    %v1461 = vunpack.c.h.b16 %v1145
    %v1462 = vunpack.c.l.b16 %v1146
    %v1463 = vunpack.c.h.b16 %v1146
    %v1464 = vunpack.c.l.b16 %v1147
    %v1465 = vunpack.c.h.b16 %v1147
    %v1466 = vunpack.c.l.b16 %v1148
    %v1467 = vunpack.c.h.b16 %v1148
    %v1468 = vunpack.c.l.b16 %v1149
    %v1469 = vunpack.c.h.b16 %v1149
    %v1470 = vunpack.c.l.b16 %v1150
    %v1471 = vunpack.c.h.b16 %v1150
    %v1472 = vunpack.c.l.b16 %v1151
    %v1473 = vunpack.c.h.b16 %v1151
    %v1474 = vunpack.c.l.b16 %v1152
    %v1475 = vunpack.c.h.b16 %v1152
    %v1476 = vunpack.c.l.b16 %v1153
    %v1477 = vunpack.c.h.b16 %v1153
    %v1478 = vunpack.c.l.b16 %v1154
    %v1479 = vunpack.c.h.b16 %v1154
    %v1480 = vunpack.c.l.b16 %v1155
    %v1481 = vunpack.c.h.b16 %v1155
    %v1482 = vunpack.c.l.b16 %v1156
    %v1483 = vunpack.c.h.b16 %v1156
    %v1484 = vunpack.c.l.b16 %v1157
    %v1485 = vunpack.c.h.b16 %v1157
    %v1486 = vunpack.c.l.b16 %v1158
    %v1487 = vunpack.c.h.b16 %v1158
    %v1488 = vunpack.c.l.b16 %v1159
    %v1489 = vunpack.c.h.b16 %v1159
    %v1490 = vunpack.c.l.b16 %v1160
    %v1491 = vunpack.c.h.b16 %v1160
    %v1492 = vunpack.c.l.b16 %v1161
    %v1493 = vunpack.c.h.b16 %v1161
    %v1494 = vunpack.c.l.b16 %v1162
    %v1495 = vunpack.c.h.b16 %v1162
    %v1496 = vunpack.c.l.b16 %v1163
    %v1497 = vunpack.c.h.b16 %v1163
    %v1498 = vunpack.c.l.b16 %v1164
    %v1499 = vunpack.c.h.b16 %v1164
    %v1500 = vunpack.c.l.b16 %v1165
    %v1501 = vunpack.c.h.b16 %v1165
    %v1502 = vunpack.c.l.b16 %v1166
    %v1503 = vunpack.c.h.b16 %v1166
    %v1504 = vunpack.c.l.b16 %v1167
    %v1505 = vunpack.c.h.b16 %v1167
    %v1506 = vunpack.c.l.b16 %v1168
    %v1507 = vunpack.c.h.b16 %v1168
    %v1508 = vunpack.c.l.b16 %v1169
    %v1509 = vunpack.c.h.b16 %v1169
    %v1510 = vunpack.c.l.b16 %v1170
    %v1511 = vunpack.c.h.b16 %v1170
    %v1512 = vunpack.c.l.b16 %v1171
    %v1513 = vunpack.c.h.b16 %v1171
    %v1514 = vunpack.c.l.b16 %v1172
    %v1515 = vunpack.c.h.b16 %v1172
    %v1516 = vunpack.c.l.b16 %v1173
    %v1517 = vunpack.c.h.b16 %v1173
    %v1518 = vunpack.c.l.b16 %v1174
    %v1519 = vunpack.c.h.b16 %v1174
    %v1520 = vunpack.c.l.b16 %v1175
    %v1521 = vunpack.c.h.b16 %v1175
    %v1522 = vunpack.c.l.b16 %v1176
    %v1523 = vunpack.c.h.b16 %v1176
    %v1524 = vunpack.c.l.b16 %v1177
    %v1525 = vunpack.c.h.b16 %v1177
    %v1526 = vunpack.c.l.b16 %v1178
    %v1527 = vunpack.c.h.b16 %v1178
    %v1528 = vunpack.c.l.b16 %v1179
    %v1529 = vunpack.c.h.b16 %v1179
    %v1530 = vunpack.c.l.b16 %v1180
    %v1531 = vunpack.c.h.b16 %v1180
    %v1532 = vunpack.c.l.b16 %v1181
    %v1533 = vunpack.c.h.b16 %v1181
    %v1534 = vunpack.c.l.b16 %v1182
    %v1535 = vunpack.c.h.b16 %v1182
    %v1536 = vunpack.c.l.b16 %v1183
    %v1537 = vunpack.c.h.b16 %v1183
    %v1538 = vunpack.c.l.b16 %v1184
    %v1539 = vunpack.c.h.b16 %v1184
    %v1540 = vunpack.c.l.b16 %v1185
    %v1541 = vunpack.c.h.b16 %v1185
    %v1542 = vunpack.c.l.b16 %v1186
    %v1543 = vunpack.c.h.b16 %v1186
    %v1544 = vunpack.c.l.b16 %v1187
    %v1545 = vunpack.c.h.b16 %v1187
    %v1546 = vunpack.c.l.b16 %v1188
    %v1547 = vunpack.c.h.b16 %v1188
    %v1548 = vunpack.c.l.b16 %v1189
    %v1549 = vunpack.c.h.b16 %v1189
    %v1550 = vunpack.c.l.b16 %v1190
    %v1551 = vunpack.c.h.b16 %v1190
    %v1552 = vunpack.c.l.b16 %v1191
    %v1553 = vunpack.c.h.b16 %v1191
    %v1554 = vunpack.c.l.b16 %v1192
    %v1555 = vunpack.c.h.b16 %v1192
    %v1556 = vunpack.c.l.b16 %v1193
    %v1557 = vunpack.c.h.b16 %v1193
    %v1558 = vunpack.c.l.b16 %v1194
    %v1559 = vunpack.c.h.b16 %v1194
    %v1560 = vunpack.c.l.b16 %v1195
    %v1561 = vunpack.c.h.b16 %v1195
    %v1562 = vunpack.c.l.b16 %v1196
    %v1563 = vunpack.c.h.b16 %v1196
    %v1564 = vunpack.c.l.b16 %v1197
    %v1565 = vunpack.c.h.b16 %v1197
    %v1566 = vunpack.c.l.b16 %v1198
    %v1567 = vunpack.c.h.b16 %v1198
    %v1568 = vunpack.c.l.b16 %v1199
    %v1569 = vunpack.c.h.b16 %v1199
    %v1570 = vunpack.c.l.b16 %v1200
    %v1571 = vunpack.c.h.b16 %v1200
    %v1572 = vunpack.c.l.b16 %v1201
    %v1573 = vunpack.c.h.b16 %v1201
    %v1574 = vunpack.c.l.b16 %v1202
    %v1575 = vunpack.c.h.b16 %v1202
    %v1576 = vunpack.c.l.b16 %v1203
    %v1577 = vunpack.c.h.b16 %v1203
    %v1578 = vunpack.c.l.b16 %v1204
    %v1579 = vunpack.c.h.b16 %v1204
    %v1580 = vunpack.c.l.b16 %v1205
    %v1581 = vunpack.c.h.b16 %v1205
    %v1582 = vunpack.c.l.b16 %v1206
    %v1583 = vunpack.c.h.b16 %v1206
    %v1584 = vunpack.c.l.b16 %v1207
    %v1585 = vunpack.c.h.b16 %v1207
    %v1586 = vunpack.c.l.b16 %v1208
    %v1587 = vunpack.c.h.b16 %v1208
    %v1588 = vunpack.c.l.b16 %v1209
    %v1589 = vunpack.c.h.b16 %v1209
    %v1590 = vunpack.c.l.b16 %v1210
    %v1591 = vunpack.c.h.b16 %v1210
    %v1592 = vunpack.c.l.b16 %v1211
    %v1593 = vunpack.c.h.b16 %v1211
    %v1594 = vunpack.c.l.b16 %v1212
    %v1595 = vunpack.c.h.b16 %v1212
    %v1596 = vunpack.c.l.b16 %v1213
    %v1597 = vunpack.c.h.b16 %v1213
    %v1598 = vpack.c.b16 %v1346, %v1342
    %v1599 = vpack.c.b16 %v1347, %v1343
    %v1600 = vpack.c.b16 %v1348, %v1344
    %v1601 = vpack.c.b16 %v1349, %v1345
    %v1602 = vpack.c.b16 %v1354, %v1350
    %v1603 = vpack.c.b16 %v1355, %v1351
    %v1604 = vpack.c.b16 %v1356, %v1352
    %v1605 = vpack.c.b16 %v1357, %v1353
    %v1606 = vpack.c.b16 %v1362, %v1358
    %v1607 = vpack.c.b16 %v1363, %v1359
    %v1608 = vpack.c.b16 %v1364, %v1360
    %v1609 = vpack.c.b16 %v1365, %v1361
    %v1610 = vpack.c.b16 %v1370, %v1366
    %v1611 = vpack.c.b16 %v1371, %v1367
    %v1612 = vpack.c.b16 %v1372, %v1368
    %v1613 = vpack.c.b16 %v1373, %v1369
    %v1614 = vpack.c.b16 %v1378, %v1374
    %v1615 = vpack.c.b16 %v1379, %v1375
    %v1616 = vpack.c.b16 %v1380, %v1376
    %v1617 = vpack.c.b16 %v1381, %v1377
    %v1618 = vpack.c.b16 %v1386, %v1382
    %v1619 = vpack.c.b16 %v1387, %v1383
    %v1620 = vpack.c.b16 %v1388, %v1384
    %v1621 = vpack.c.b16 %v1389, %v1385
    %v1622 = vpack.c.b16 %v1394, %v1390
    %v1623 = vpack.c.b16 %v1395, %v1391
    %v1624 = vpack.c.b16 %v1396, %v1392
    %v1625 = vpack.c.b16 %v1397, %v1393
    %v1626 = vpack.c.b16 %v1402, %v1398
    %v1627 = vpack.c.b16 %v1403, %v1399
    %v1628 = vpack.c.b16 %v1404, %v1400
    %v1629 = vpack.c.b16 %v1405, %v1401
    %v1630 = vpack.c.b16 %v1410, %v1406
    %v1631 = vpack.c.b16 %v1411, %v1407
    %v1632 = vpack.c.b16 %v1412, %v1408
    %v1633 = vpack.c.b16 %v1413, %v1409
    %v1634 = vpack.c.b16 %v1418, %v1414
    %v1635 = vpack.c.b16 %v1419, %v1415
    %v1636 = vpack.c.b16 %v1420, %v1416
    %v1637 = vpack.c.b16 %v1421, %v1417
    %v1638 = vpack.c.b16 %v1426, %v1422
    %v1639 = vpack.c.b16 %v1427, %v1423
    %v1640 = vpack.c.b16 %v1428, %v1424
    %v1641 = vpack.c.b16 %v1429, %v1425
    %v1642 = vpack.c.b16 %v1434, %v1430
    %v1643 = vpack.c.b16 %v1435, %v1431
    %v1644 = vpack.c.b16 %v1436, %v1432
    %v1645 = vpack.c.b16 %v1437, %v1433
    %v1646 = vpack.c.b16 %v1442, %v1438
    %v1647 = vpack.c.b16 %v1443, %v1439
    %v1648 = vpack.c.b16 %v1444, %v1440
    %v1649 = vpack.c.b16 %v1445, %v1441
    %v1650 = vpack.c.b16 %v1450, %v1446
    %v1651 = vpack.c.b16 %v1451, %v1447
    %v1652 = vpack.c.b16 %v1452, %v1448
    %v1653 = vpack.c.b16 %v1453, %v1449
    %v1654 = vpack.c.b16 %v1458, %v1454
    %v1655 = vpack.c.b16 %v1459, %v1455
    %v1656 = vpack.c.b16 %v1460, %v1456
    %v1657 = vpack.c.b16 %v1461, %v1457
    %v1658 = vpack.c.b16 %v1466, %v1462
    %v1659 = vpack.c.b16 %v1467, %v1463
    %v1660 = vpack.c.b16 %v1468, %v1464
    %v1661 = vpack.c.b16 %v1469, %v1465
    %v1662 = vpack.c.b16 %v1474, %v1470
    %v1663 = vpack.c.b16 %v1475, %v1471
    %v1664 = vpack.c.b16 %v1476, %v1472
    %v1665 = vpack.c.b16 %v1477, %v1473
    %v1666 = vpack.c.b16 %v1482, %v1478
    %v1667 = vpack.c.b16 %v1483, %v1479
    %v1668 = vpack.c.b16 %v1484, %v1480
    %v1669 = vpack.c.b16 %v1485, %v1481
    %v1670 = vpack.c.b16 %v1490, %v1486
    %v1671 = vpack.c.b16 %v1491, %v1487
    %v1672 = vpack.c.b16 %v1492, %v1488
    %v1673 = vpack.c.b16 %v1493, %v1489
    %v1674 = vpack.c.b16 %v1498, %v1494
    %v1675 = vpack.c.b16 %v1499, %v1495
    %v1676 = vpack.c.b16 %v1500, %v1496
    %v1677 = vpack.c.b16 %v1501, %v1497
    %v1678 = vpack.c.b16 %v1506, %v1502
    %v1679 = vpack.c.b16 %v1507, %v1503
    %v1680 = vpack.c.b16 %v1508, %v1504
    %v1681 = vpack.c.b16 %v1509, %v1505
    %v1682 = vpack.c.b16 %v1514, %v1510
    %v1683 = vpack.c.b16 %v1515, %v1511
    %v1684 = vpack.c.b16 %v1516, %v1512
    %v1685 = vpack.c.b16 %v1517, %v1513
    %v1686 = vpack.c.b16 %v1522, %v1518
    %v1687 = vpack.c.b16 %v1523, %v1519
    %v1688 = vpack.c.b16 %v1524, %v1520
    %v1689 = vpack.c.b16 %v1525, %v1521
    %v1690 = vpack.c.b16 %v1530, %v1526
    %v1691 = vpack.c.b16 %v1531, %v1527
    %v1692 = vpack.c.b16 %v1532, %v1528
    %v1693 = vpack.c.b16 %v1533, %v1529
    %v1694 = vpack.c.b16 %v1538, %v1534
    %v1695 = vpack.c.b16 %v1539, %v1535
    %v1696 = vpack.c.b16 %v1540, %v1536
    %v1697 = vpack.c.b16 %v1541, %v1537
    %v1698 = vpack.c.b16 %v1546, %v1542
    %v1699 = vpack.c.b16 %v1547, %v1543
    %v1700 = vpack.c.b16 %v1548, %v1544
    %v1701 = vpack.c.b16 %v1549, %v1545
    %v1702 = vpack.c.b16 %v1554, %v1550
    %v1703 = vpack.c.b16 %v1555, %v1551
    %v1704 = vpack.c.b16 %v1556, %v1552
    %v1705 = vpack.c.b16 %v1557, %v1553
    %v1706 = vpack.c.b16 %v1562, %v1558
    %v1707 = vpack.c.b16 %v1563, %v1559
    %v1708 = vpack.c.b16 %v1564, %v1560
    %v1709 = vpack.c.b16 %v1565, %v1561
    %v1710 = vpack.c.b16 %v1570, %v1566
    %v1711 = vpack.c.b16 %v1571, %v1567
    %v1712 = vpack.c.b16 %v1572, %v1568
    %v1713 = vpack.c.b16 %v1573, %v1569
    %v1714 = vpack.c.b16 %v1578, %v1574
    %v1715 = vpack.c.b16 %v1579, %v1575
    %v1716 = vpack.c.b16 %v1580, %v1576
    %v1717 = vpack.c.b16 %v1581, %v1577
    %v1718 = vpack.c.b16 %v1586, %v1582
    %v1719 = vpack.c.b16 %v1587, %v1583
    %v1720 = vpack.c.b16 %v1588, %v1584
    %v1721 = vpack.c.b16 %v1589, %v1585
    %v1722 = vpack.c.b16 %v1594, %v1590
    %v1723 = vpack.c.b16 %v1595, %v1591
    %v1724 = vpack.c.b16 %v1596, %v1592
    %v1725 = vpack.c.b16 %v1597, %v1593
    %1854 = vmatprep.subr.bf16.mxu0 %v1599
    %1855 = vmatpush1.bf16.msra.mxu0 %v1598
    %1856 = vmatprep.subr.bf16.mxu0 %v1603
    %1857 = vmatpush1.bf16.msra.mxu0 %v1602
    %1858 = vmatprep.subr.bf16.mxu0 %v1607
    %1859 = vmatpush1.bf16.msra.mxu0 %v1606
    %1860 = vmatprep.subr.bf16.mxu0 %v1611
    %1861 = vmatpush1.bf16.msra.mxu0 %v1610
    %1862 = vmatprep.subr.bf16.mxu0 %v1615
    %1863 = vmatpush1.bf16.msra.mxu0 %v1614
    %1864 = vmatprep.subr.bf16.mxu0 %v1619
    %1865 = vmatpush1.bf16.msra.mxu0 %v1618
    %1866 = vmatprep.subr.bf16.mxu0 %v1623
    %1867 = vmatpush1.bf16.msra.mxu0 %v1622
    %1868 = vmatprep.subr.bf16.mxu0 %v1627
    %1869 = vmatpush1.bf16.msra.mxu0 %v1626
    %1870 = vmatprep.subr.bf16.mxu0 %v1631
    %1871 = vmatpush1.bf16.msra.mxu0 %v1630
    %1872 = vmatprep.subr.bf16.mxu0 %v1635
    %1873 = vmatpush1.bf16.msra.mxu0 %v1634
    %1874 = vmatprep.subr.bf16.mxu0 %v1639
    %1875 = vmatpush1.bf16.msra.mxu0 %v1638
    %1876 = vmatprep.subr.bf16.mxu0 %v1643
    %1877 = vmatpush1.bf16.msra.mxu0 %v1642
    %1878 = vmatprep.subr.bf16.mxu0 %v1647
    %1879 = vmatpush1.bf16.msra.mxu0 %v1646
    %1880 = vmatprep.subr.bf16.mxu0 %v1651
    %1881 = vmatpush1.bf16.msra.mxu0 %v1650
    %1882 = vmatprep.subr.bf16.mxu0 %v1655
    %1883 = vmatpush1.bf16.msra.mxu0 %v1654
    %1884 = vmatprep.subr.bf16.mxu0 %v1659
    %1885 = vmatpush1.bf16.msra.mxu0 %v1658
    %1886 = vmatprep.mubr.bf16.mxu0 %v1082
    %1887 = vmatmul.mubr.bf16.gmra.mrb[0].mxu0 %v1081
    %v1888 = vpop.f32.mrb[0].mxu0
    %v1889 = vadd.f32 0.0, %v1888
    %v1890 = vpop.f32.mrb[0].mxu0
    %v1891 = vadd.f32 0.0, %v1890
    %v1892 = vpop.f32.mrb[0].mxu0
    %v1893 = vpop.f32.mrb[0].mxu0
    %1894 = vdwg.mxu0
    %1895 = vmatprep.subr.bf16.mxu0 %v1663
    %1896 = vmatpush1.bf16.msra.mxu0 %v1662
    %1897 = vmatprep.subr.bf16.mxu0 %v1667
    %1898 = vmatpush1.bf16.msra.mxu0 %v1666
    %1899 = vmatprep.subr.bf16.mxu0 %v1671
    %1900 = vmatpush1.bf16.msra.mxu0 %v1670
    %1901 = vmatprep.subr.bf16.mxu0 %v1675
    %1902 = vmatpush1.bf16.msra.mxu0 %v1674
    %1903 = vmatprep.subr.bf16.mxu0 %v1679
    %1904 = vmatpush1.bf16.msra.mxu0 %v1678
    %1905 = vmatprep.subr.bf16.mxu0 %v1683
    %1906 = vmatpush1.bf16.msra.mxu0 %v1682
    %1907 = vmatprep.subr.bf16.mxu0 %v1687
    %1908 = vmatpush1.bf16.msra.mxu0 %v1686
    %1909 = vmatprep.subr.bf16.mxu0 %v1691
    %1910 = vmatpush1.bf16.msra.mxu0 %v1690
    %1911 = vmatprep.subr.bf16.mxu0 %v1695
    %1912 = vmatpush1.bf16.msra.mxu0 %v1694
    %1913 = vmatprep.subr.bf16.mxu0 %v1699
    %1914 = vmatpush1.bf16.msra.mxu0 %v1698
    %1915 = vmatprep.subr.bf16.mxu0 %v1703
    %1916 = vmatpush1.bf16.msra.mxu0 %v1702
    %1917 = vmatprep.subr.bf16.mxu0 %v1707
    %1918 = vmatpush1.bf16.msra.mxu0 %v1706
    %1919 = vmatprep.subr.bf16.mxu0 %v1711
    %1920 = vmatpush1.bf16.msra.mxu0 %v1710
    %1921 = vmatprep.subr.bf16.mxu0 %v1715
    %1922 = vmatpush1.bf16.msra.mxu0 %v1714
    %1923 = vmatprep.subr.bf16.mxu0 %v1719
    %1924 = vmatpush1.bf16.msra.mxu0 %v1718
    %1925 = vmatprep.subr.bf16.mxu0 %v1723
    %1926 = vmatpush1.bf16.msra.mxu0 %v1722
    %1927 = vmatprep.mubr.bf16.mxu0 %v1084
    %1928 = vmatmul.mubr.bf16.gmra.mrb[0].mxu0 %v1083
    %v1929 = vpop.f32.mrb[0].mxu0
    %v1930 = vadd.f32 %v1889, %v1929
    %v1931 = vpop.f32.mrb[0].mxu0
    %v1932 = vadd.f32 %v1891, %v1931
    %v1933 = vpop.f32.mrb[0].mxu0
    %v1934 = vpop.f32.mrb[0].mxu0
    %1935 = vdwg.mxu0
    %1936 = vmatprep.subr.bf16.mxu0 %v1601
    %1937 = vmatpush1.bf16.msra.mxu0 %v1600
    %1938 = vmatprep.subr.bf16.mxu0 %v1605
    %1939 = vmatpush1.bf16.msra.mxu0 %v1604
    %1940 = vmatprep.subr.bf16.mxu0 %v1609
    %1941 = vmatpush1.bf16.msra.mxu0 %v1608
    %1942 = vmatprep.subr.bf16.mxu0 %v1613
    %1943 = vmatpush1.bf16.msra.mxu0 %v1612
    %1944 = vmatprep.subr.bf16.mxu0 %v1617
    %1945 = vmatpush1.bf16.msra.mxu0 %v1616
    %1946 = vmatprep.subr.bf16.mxu0 %v1621
    %1947 = vmatpush1.bf16.msra.mxu0 %v1620
    %1948 = vmatprep.subr.bf16.mxu0 %v1625
    %1949 = vmatpush1.bf16.msra.mxu0 %v1624
    %1950 = vmatprep.subr.bf16.mxu0 %v1629
    %1951 = vmatpush1.bf16.msra.mxu0 %v1628
    %1952 = vmatprep.subr.bf16.mxu0 %v1633
    %1953 = vmatpush1.bf16.msra.mxu0 %v1632
    %1954 = vmatprep.subr.bf16.mxu0 %v1637
    %1955 = vmatpush1.bf16.msra.mxu0 %v1636
    %1956 = vmatprep.subr.bf16.mxu0 %v1641
    %1957 = vmatpush1.bf16.msra.mxu0 %v1640
    %1958 = vmatprep.subr.bf16.mxu0 %v1645
    %1959 = vmatpush1.bf16.msra.mxu0 %v1644
    %1960 = vmatprep.subr.bf16.mxu0 %v1649
    %1961 = vmatpush1.bf16.msra.mxu0 %v1648
    %1962 = vmatprep.subr.bf16.mxu0 %v1653
    %1963 = vmatpush1.bf16.msra.mxu0 %v1652
    %1964 = vmatprep.subr.bf16.mxu0 %v1657
    %1965 = vmatpush1.bf16.msra.mxu0 %v1656
    %1966 = vmatprep.subr.bf16.mxu0 %v1661
    %1967 = vmatpush1.bf16.msra.mxu0 %v1660
    %1968 = vmatprep.mubr.bf16.mxu0 %v1082
    %1969 = vmatmul.mubr.bf16.gmra.mrb[0].mxu0 %v1081
    %v1970 = vpop.f32.mrb[0].mxu0
    %v1971 = vadd.f32 0.0, %v1970
    %v1972 = vpop.f32.mrb[0].mxu0
    %v1973 = vadd.f32 0.0, %v1972
    %v1974 = vpop.f32.mrb[0].mxu0
    %v1975 = vpop.f32.mrb[0].mxu0
    %1976 = vdwg.mxu0
    %1977 = vmatprep.subr.bf16.mxu0 %v1665
    %1978 = vmatpush1.bf16.msra.mxu0 %v1664
    %1979 = vmatprep.subr.bf16.mxu0 %v1669
    %1980 = vmatpush1.bf16.msra.mxu0 %v1668
    %1981 = vmatprep.subr.bf16.mxu0 %v1673
    %1982 = vmatpush1.bf16.msra.mxu0 %v1672
    %1983 = vmatprep.subr.bf16.mxu0 %v1677
    %1984 = vmatpush1.bf16.msra.mxu0 %v1676
    %1985 = vmatprep.subr.bf16.mxu0 %v1681
    %1986 = vmatpush1.bf16.msra.mxu0 %v1680
    %1987 = vmatprep.subr.bf16.mxu0 %v1685
    %1988 = vmatpush1.bf16.msra.mxu0 %v1684
    %1989 = vmatprep.subr.bf16.mxu0 %v1689
    %1990 = vmatpush1.bf16.msra.mxu0 %v1688
    %1991 = vmatprep.subr.bf16.mxu0 %v1693
    %1992 = vmatpush1.bf16.msra.mxu0 %v1692
    %1993 = vmatprep.subr.bf16.mxu0 %v1697
    %1994 = vmatpush1.bf16.msra.mxu0 %v1696
    %1995 = vmatprep.subr.bf16.mxu0 %v1701
    %1996 = vmatpush1.bf16.msra.mxu0 %v1700
    %1997 = vmatprep.subr.bf16.mxu0 %v1705
    %1998 = vmatpush1.bf16.msra.mxu0 %v1704
    %1999 = vmatprep.subr.bf16.mxu0 %v1709
    %2000 = vmatpush1.bf16.msra.mxu0 %v1708
    %2001 = vmatprep.subr.bf16.mxu0 %v1713
    %2002 = vmatpush1.bf16.msra.mxu0 %v1712
    %2003 = vmatprep.subr.bf16.mxu0 %v1717
    %2004 = vmatpush1.bf16.msra.mxu0 %v1716
    %2005 = vmatprep.subr.bf16.mxu0 %v1721
    %2006 = vmatpush1.bf16.msra.mxu0 %v1720
    %2007 = vmatprep.subr.bf16.mxu0 %v1725
    %2008 = vmatpush1.bf16.msra.mxu0 %v1724
    %2009 = vmatprep.mubr.bf16.mxu0 %v1084
    %2010 = vmatmul.mubr.bf16.gmra.mrb[0].mxu0 %v1083
    %v2011 = vpop.f32.mrb[0].mxu0
    %v2012 = vadd.f32 %v1971, %v2011
    %v2013 = vpop.f32.mrb[0].mxu0
    %v2014 = vadd.f32 %v1973, %v2013
    %v2015 = vpop.f32.mrb[0].mxu0
    %v2016 = vpop.f32.mrb[0].mxu0
    %2017 = vdwg.mxu0
    %v2018 = vlaneseq
    %v2019 = vshrl.u32 %v2018, 7
    %v2020 = vsub.s32 1, %v2019
    %v2021 = vrot.slane %v44, %v2020
    %v2022 = vlaneseq
    %v2023 = vshrl.u32 %v2022, 7
    %v2024 = vsub.s32 5, %v2023
    %v2025 = vrot.slane %v44, %v2024
    %v2026 = vlaneseq
    %v2027 = vshrl.u32 %v2026, 7
    %v2028 = vsub.s32 1, %v2027
    %v2029 = vrot.slane %v45, %v2028
    %v2030 = vlaneseq
    %v2031 = vshrl.u32 %v2030, 7
    %v2032 = vsub.s32 5, %v2031
    %v2033 = vrot.slane %v45, %v2032
    %v2038 = vlaneseq
    %v2039 = vshrl.u32 %v2038, 7
    %v2040 = vsub.s32 1, %v2039
    %v2041 = vrot.slane %v2021, %v2040
    %v2042 = vlaneseq
    %v2043 = vshrl.u32 %v2042, 7
    %v2044 = vsub.s32 1, %v2043
    %v2045 = vrot.slane %v2025, %v2044
    %v2046 = vlaneseq
    %v2047 = vshrl.u32 %v2046, 7
    %v2048 = vsub.s32 1, %v2047
    %v2049 = vrot.slane %v2029, %v2048
    %v2050 = vlaneseq
    %v2051 = vshrl.u32 %v2050, 7
    %v2052 = vsub.s32 1, %v2051
    %v2053 = vrot.slane %v2033, %v2052
    %v2054 = vmul.f32 %v1930, %v2041
    %v2055 = vmul.f32 %v1932, %v2045
    %v2056 = vmul.f32 %v2012, %v2049
    %v2057 = vmul.f32 %v2014, %v2053
    %v2058 = vlaneseq
    %v2059 = vshrl.u32 %v2058, 7
    %v2060 = vsub.s32 3, %v2059
    %v2061 = vrot.slane %v44, %v2060
    %v2062 = vlaneseq
    %v2063 = vshrl.u32 %v2062, 7
    %v2064 = vsub.s32 7, %v2063
    %v2065 = vrot.slane %v44, %v2064
    %v2066 = vlaneseq
    %v2067 = vshrl.u32 %v2066, 7
    %v2068 = vsub.s32 3, %v2067
    %v2069 = vrot.slane %v45, %v2068
    %v2070 = vlaneseq
    %v2071 = vshrl.u32 %v2070, 7
    %v2072 = vsub.s32 7, %v2071
    %v2073 = vrot.slane %v45, %v2072
    %v2078 = vlaneseq
    %v2079 = vshrl.u32 %v2078, 7
    %v2080 = vsub.s32 3, %v2079
    %v2081 = vrot.slane %v2061, %v2080
    %v2082 = vlaneseq
    %v2083 = vshrl.u32 %v2082, 7
    %v2084 = vsub.s32 3, %v2083
    %v2085 = vrot.slane %v2065, %v2084
    %v2086 = vlaneseq
    %v2087 = vshrl.u32 %v2086, 7
    %v2088 = vsub.s32 3, %v2087
    %v2089 = vrot.slane %v2069, %v2088
    %v2090 = vlaneseq
    %v2091 = vshrl.u32 %v2090, 7
    %v2092 = vsub.s32 3, %v2091
    %v2093 = vrot.slane %v2073, %v2092
    %v2094 = vadd.f32 %v2054, %v2081
    %v2095 = vadd.f32 %v2055, %v2085
    %v2096 = vadd.f32 %v2056, %v2089
    %v2097 = vadd.f32 %v2057, %v2093
    %vm2098 = vcmp.gt.f32.partialorder %v2094, 0.0
    %vm2099 = vcmp.gt.f32.partialorder %v2095, 0.0
    %vm2100 = vcmp.gt.f32.partialorder %v2096, 0.0
    %vm2101 = vcmp.gt.f32.partialorder %v2097, 0.0
    %v2102 = vmul.f32 %v2094, 0.01
    %v2103 = vmul.f32 %v2095, 0.01
    %v2104 = vmul.f32 %v2096, 0.01
    %v2105 = vmul.f32 %v2097, 0.01
    %v2106 = vsel %vm2098, %v2094, %v2102
    %v2107 = vsel %vm2099, %v2095, %v2103
    %v2108 = vsel %vm2100, %v2096, %v2104
    %v2109 = vsel %vm2101, %v2097, %v2105
    %v2110 = vld [vmem:[%s4] sm:$0xff]
    %v2111 = vld [vmem:[%s4 + $0x8] sm:$0xff]
    %v2112 = vld [vmem:[%s4 + $0x10] sm:$0xff]
    %v2113 = vld [vmem:[%s4 + $0x18] sm:$0xff]
    %v2114 = vld [vmem:[%s4 + $0x20] sm:$0xff]
    %v2115 = vld [vmem:[%s4 + $0x28] sm:$0xff]
    %v2116 = vld [vmem:[%s4 + $0x30] sm:$0xff]
    %v2117 = vld [vmem:[%s4 + $0x38] sm:$0xff]
    %v2118 = vld [vmem:[%s4 + $0x40] sm:$0xff]
    %v2119 = vld [vmem:[%s4 + $0x48] sm:$0xff]
    %v2120 = vld [vmem:[%s4 + $0x50] sm:$0xff]
    %v2121 = vld [vmem:[%s4 + $0x58] sm:$0xff]
    %v2122 = vld [vmem:[%s4 + $0x60] sm:$0xff]
    %v2123 = vld [vmem:[%s4 + $0x68] sm:$0xff]
    %v2124 = vld [vmem:[%s4 + $0x70] sm:$0xff]
    %v2125 = vld [vmem:[%s4 + $0x78] sm:$0xff]
    %v2126 = vld [vmem:[%s4 + $0x80] sm:$0xff]
    %v2127 = vld [vmem:[%s4 + $0x88] sm:$0xff]
    %v2128 = vld [vmem:[%s4 + $0x90] sm:$0xff]
    %v2129 = vld [vmem:[%s4 + $0x98] sm:$0xff]
    %v2130 = vld [vmem:[%s4 + $0xa0] sm:$0xff]
    %v2131 = vld [vmem:[%s4 + $0xa8] sm:$0xff]
    %v2132 = vld [vmem:[%s4 + $0xb0] sm:$0xff]
    %v2133 = vld [vmem:[%s4 + $0xb8] sm:$0xff]
    %v2134 = vld [vmem:[%s4 + $0xc0] sm:$0xff]
    %v2135 = vld [vmem:[%s4 + $0xc8] sm:$0xff]
    %v2136 = vld [vmem:[%s4 + $0xd0] sm:$0xff]
    %v2137 = vld [vmem:[%s4 + $0xd8] sm:$0xff]
    %v2138 = vld [vmem:[%s4 + $0xe0] sm:$0xff]
    %v2139 = vld [vmem:[%s4 + $0xe8] sm:$0xff]
    %v2140 = vld [vmem:[%s4 + $0xf0] sm:$0xff]
    %v2141 = vld [vmem:[%s4 + $0xf8] sm:$0xff]
    %v2142 = vld [vmem:[%s4 + $0x100] sm:$0xff]
    %v2143 = vld [vmem:[%s4 + $0x108] sm:$0xff]
    %v2144 = vld [vmem:[%s4 + $0x110] sm:$0xff]
    %v2145 = vld [vmem:[%s4 + $0x118] sm:$0xff]
    %v2146 = vld [vmem:[%s4 + $0x120] sm:$0xff]
    %v2147 = vld [vmem:[%s4 + $0x128] sm:$0xff]
    %v2148 = vld [vmem:[%s4 + $0x130] sm:$0xff]
    %v2149 = vld [vmem:[%s4 + $0x138] sm:$0xff]
    %v2150 = vld [vmem:[%s4 + $0x140] sm:$0xff]
    %v2151 = vld [vmem:[%s4 + $0x148] sm:$0xff]
    %v2152 = vld [vmem:[%s4 + $0x150] sm:$0xff]
    %v2153 = vld [vmem:[%s4 + $0x158] sm:$0xff]
    %v2154 = vld [vmem:[%s4 + $0x160] sm:$0xff]
    %v2155 = vld [vmem:[%s4 + $0x168] sm:$0xff]
    %v2156 = vld [vmem:[%s4 + $0x170] sm:$0xff]
    %v2157 = vld [vmem:[%s4 + $0x178] sm:$0xff]
    %v2158 = vld [vmem:[%s4 + $0x180] sm:$0xff]
    %v2159 = vld [vmem:[%s4 + $0x188] sm:$0xff]
    %v2160 = vld [vmem:[%s4 + $0x190] sm:$0xff]
    %v2161 = vld [vmem:[%s4 + $0x198] sm:$0xff]
    %v2162 = vld [vmem:[%s4 + $0x1a0] sm:$0xff]
    %v2163 = vld [vmem:[%s4 + $0x1a8] sm:$0xff]
    %v2164 = vld [vmem:[%s4 + $0x1b0] sm:$0xff]
    %v2165 = vld [vmem:[%s4 + $0x1b8] sm:$0xff]
    %v2166 = vld [vmem:[%s4 + $0x1c0] sm:$0xff]
    %v2167 = vld [vmem:[%s4 + $0x1c8] sm:$0xff]
    %v2168 = vld [vmem:[%s4 + $0x1d0] sm:$0xff]
    %v2169 = vld [vmem:[%s4 + $0x1d8] sm:$0xff]
    %v2170 = vld [vmem:[%s4 + $0x1e0] sm:$0xff]
    %v2171 = vld [vmem:[%s4 + $0x1e8] sm:$0xff]
    %v2172 = vld [vmem:[%s4 + $0x1f0] sm:$0xff]
    %v2173 = vld [vmem:[%s4 + $0x1f8] sm:$0xff]
    %v2174 = vlaneseq
    %v2175 = vshrl.u32 %v2174, 7
    %v2176 = vsub.s32 6, %v2175
    %v2177 = vrot.slane %v46, %v2176
    %2178 = vmatprep.subr.mxu0 0.0
    %2179 = vmatpush1.msra.mxu0 %v2110
    %2180 = vmatprep.subr.mxu0 0.0
    %2181 = vmatpush1.msra.mxu0 %v2111
    %2182 = vmatprep.subr.mxu0 0.0
    %2183 = vmatpush1.msra.mxu0 %v2112
    %2184 = vmatprep.subr.mxu0 0.0
    %2185 = vmatpush1.msra.mxu0 %v2113
    %2186 = vmatprep.subr.mxu0 0.0
    %2187 = vmatpush1.msra.mxu0 %v2114
    %2188 = vmatprep.subr.mxu0 0.0
    %2189 = vmatpush1.msra.mxu0 %v2115
    %2190 = vmatprep.subr.mxu0 0.0
    %2191 = vmatpush1.msra.mxu0 %v2116
    %2192 = vmatprep.subr.mxu0 0.0
    %2193 = vmatpush1.msra.mxu0 %v2117
    %2194 = vmatprep.subr.mxu0 0.0
    %2195 = vmatpush1.msra.mxu0 %v2118
    %2196 = vmatprep.subr.mxu0 0.0
    %2197 = vmatpush1.msra.mxu0 %v2119
    %2198 = vmatprep.subr.mxu0 0.0
    %2199 = vmatpush1.msra.mxu0 %v2120
    %2200 = vmatprep.subr.mxu0 0.0
    %2201 = vmatpush1.msra.mxu0 %v2121
    %2202 = vmatprep.subr.mxu0 0.0
    %2203 = vmatpush1.msra.mxu0 %v2122
    %2204 = vmatprep.subr.mxu0 0.0
    %2205 = vmatpush1.msra.mxu0 %v2123
    %2206 = vmatprep.subr.mxu0 0.0
    %2207 = vmatpush1.msra.mxu0 %v2124
    %2208 = vmatprep.subr.mxu0 0.0
    %2209 = vmatpush1.msra.mxu0 %v2125
    %2210 = vmatprep.subr.mxu0 0.0
    %2211 = vmatpush1.msra.mxu0 %v2126
    %2212 = vmatprep.subr.mxu0 0.0
    %2213 = vmatpush1.msra.mxu0 %v2127
    %2214 = vmatprep.subr.mxu0 0.0
    %2215 = vmatpush1.msra.mxu0 %v2128
    %2216 = vmatprep.subr.mxu0 0.0
    %2217 = vmatpush1.msra.mxu0 %v2129
    %2218 = vmatprep.subr.mxu0 0.0
    %2219 = vmatpush1.msra.mxu0 %v2130
    %2220 = vmatprep.subr.mxu0 0.0
    %2221 = vmatpush1.msra.mxu0 %v2131
    %2222 = vmatprep.subr.mxu0 0.0
    %2223 = vmatpush1.msra.mxu0 %v2132
    %2224 = vmatprep.subr.mxu0 0.0
    %2225 = vmatpush1.msra.mxu0 %v2133
    %2226 = vmatprep.subr.mxu0 0.0
    %2227 = vmatpush1.msra.mxu0 %v2134
    %2228 = vmatprep.subr.mxu0 0.0
    %2229 = vmatpush1.msra.mxu0 %v2135
    %2230 = vmatprep.subr.mxu0 0.0
    %2231 = vmatpush1.msra.mxu0 %v2136
    %2232 = vmatprep.subr.mxu0 0.0
    %2233 = vmatpush1.msra.mxu0 %v2137
    %2234 = vmatprep.subr.mxu0 0.0
    %2235 = vmatpush1.msra.mxu0 %v2138
    %2236 = vmatprep.subr.mxu0 0.0
    %2237 = vmatpush1.msra.mxu0 %v2139
    %2238 = vmatprep.subr.mxu0 0.0
    %2239 = vmatpush1.msra.mxu0 %v2140
    %2240 = vmatprep.subr.mxu0 0.0
    %2241 = vmatpush1.msra.mxu0 %v2141
    %2242 = vmatprep.mubr.f32.mxu0 %v2107
    %2243 = vmatmul.mubr.f32.gmra.mrb[0].mxu0 %v2106
    %v2244 = vpop.f32.mrb[0].mxu0
    %v2245 = vadd.f32 %v2177, %v2244
    %v2246 = vpop.f32.mrb[0].mxu0
    %2247 = vdwg.mxu0
    %2248 = vmatprep.subr.mxu0 0.0
    %2249 = vmatpush1.msra.mxu0 %v2142
    %2250 = vmatprep.subr.mxu0 0.0
    %2251 = vmatpush1.msra.mxu0 %v2143
    %2252 = vmatprep.subr.mxu0 0.0
    %2253 = vmatpush1.msra.mxu0 %v2144
    %2254 = vmatprep.subr.mxu0 0.0
    %2255 = vmatpush1.msra.mxu0 %v2145
    %2256 = vmatprep.subr.mxu0 0.0
    %2257 = vmatpush1.msra.mxu0 %v2146
    %2258 = vmatprep.subr.mxu0 0.0
    %2259 = vmatpush1.msra.mxu0 %v2147
    %2260 = vmatprep.subr.mxu0 0.0
    %2261 = vmatpush1.msra.mxu0 %v2148
    %2262 = vmatprep.subr.mxu0 0.0
    %2263 = vmatpush1.msra.mxu0 %v2149
    %2264 = vmatprep.subr.mxu0 0.0
    %2265 = vmatpush1.msra.mxu0 %v2150
    %2266 = vmatprep.subr.mxu0 0.0
    %2267 = vmatpush1.msra.mxu0 %v2151
    %2268 = vmatprep.subr.mxu0 0.0
    %2269 = vmatpush1.msra.mxu0 %v2152
    %2270 = vmatprep.subr.mxu0 0.0
    %2271 = vmatpush1.msra.mxu0 %v2153
    %2272 = vmatprep.subr.mxu0 0.0
    %2273 = vmatpush1.msra.mxu0 %v2154
    %2274 = vmatprep.subr.mxu0 0.0
    %2275 = vmatpush1.msra.mxu0 %v2155
    %2276 = vmatprep.subr.mxu0 0.0
    %2277 = vmatpush1.msra.mxu0 %v2156
    %2278 = vmatprep.subr.mxu0 0.0
    %2279 = vmatpush1.msra.mxu0 %v2157
    %2280 = vmatprep.subr.mxu0 0.0
    %2281 = vmatpush1.msra.mxu0 %v2158
    %2282 = vmatprep.subr.mxu0 0.0
    %2283 = vmatpush1.msra.mxu0 %v2159
    %2284 = vmatprep.subr.mxu0 0.0
    %2285 = vmatpush1.msra.mxu0 %v2160
    %2286 = vmatprep.subr.mxu0 0.0
    %2287 = vmatpush1.msra.mxu0 %v2161
    %2288 = vmatprep.subr.mxu0 0.0
    %2289 = vmatpush1.msra.mxu0 %v2162
    %2290 = vmatprep.subr.mxu0 0.0
    %2291 = vmatpush1.msra.mxu0 %v2163
    %2292 = vmatprep.subr.mxu0 0.0
    %2293 = vmatpush1.msra.mxu0 %v2164
    %2294 = vmatprep.subr.mxu0 0.0
    %2295 = vmatpush1.msra.mxu0 %v2165
    %2296 = vmatprep.subr.mxu0 0.0
    %2297 = vmatpush1.msra.mxu0 %v2166
    %2298 = vmatprep.subr.mxu0 0.0
    %2299 = vmatpush1.msra.mxu0 %v2167
    %2300 = vmatprep.subr.mxu0 0.0
    %2301 = vmatpush1.msra.mxu0 %v2168
    %2302 = vmatprep.subr.mxu0 0.0
    %2303 = vmatpush1.msra.mxu0 %v2169
    %2304 = vmatprep.subr.mxu0 0.0
    %2305 = vmatpush1.msra.mxu0 %v2170
    %2306 = vmatprep.subr.mxu0 0.0
    %2307 = vmatpush1.msra.mxu0 %v2171
    %2308 = vmatprep.subr.mxu0 0.0
    %2309 = vmatpush1.msra.mxu0 %v2172
    %2310 = vmatprep.subr.mxu0 0.0
    %2311 = vmatpush1.msra.mxu0 %v2173
    %2312 = vmatprep.mubr.f32.mxu0 %v2109
    %2313 = vmatmul.mubr.f32.gmra.mrb[0].mxu0 %v2108
    %v2314 = vpop.f32.mrb[0].mxu0
    %v2315 = vadd.f32 %v2245, %v2314
    %v2316 = vpop.f32.mrb[0].mxu0
    %2317 = vdwg.mxu0
    %v2318 = vld [vmem:[%s6] sm:$0xff]
    %v2319 = vld [vmem:[%s6 + $0x8] sm:$0xff]
    %v2320 = vld [vmem:[%s6 + $0x10] sm:$0xff]
    %v2321 = vld [vmem:[%s6 + $0x18] sm:$0xff]
    %v2322 = vld [vmem:[%s6 + $0x20] sm:$0xff]
    %v2323 = vld [vmem:[%s6 + $0x28] sm:$0xff]
    %v2324 = vld [vmem:[%s6 + $0x30] sm:$0xff]
    %v2325 = vld [vmem:[%s6 + $0x38] sm:$0xff]
    %vm2326 = vcmask 130048
    %v2328 = vsel %vm2326, %v2315, 0
    %2330 = vmatprep.subr.mxu0 %v2319
    %2331 = vmatpush1.msra.mxu0 %v2318
    %2332 = vmatprep.subr.mxu0 %v2323
    %2333 = vmatpush1.msra.mxu0 %v2322
    %2334 = vmatprep.subr.mxu0 0.0
    %2335 = vmatpush1.msra.mxu0 0.0
    %2336 = vmatprep.subr.mxu0 0.0
    %2337 = vmatpush1.msra.mxu0 0.0
    %2338 = vmatprep.subr.mxu0 0.0
    %2339 = vmatpush1.msra.mxu0 0.0
    %2340 = vmatprep.subr.mxu0 0.0
    %2341 = vmatpush1.msra.mxu0 0.0
    %2342 = vmatprep.subr.mxu0 0.0
    %2343 = vmatpush1.msra.mxu0 0.0
    %2344 = vmatprep.subr.mxu0 0.0
    %2345 = vmatpush1.msra.mxu0 0.0
    %2346 = vmatprep.subr.mxu0 0.0
    %2347 = vmatpush1.msra.mxu0 0.0
    %2348 = vmatprep.subr.mxu0 0.0
    %2349 = vmatpush1.msra.mxu0 0.0
    %2350 = vmatprep.subr.mxu0 0.0
    %2351 = vmatpush1.msra.mxu0 0.0
    %2352 = vmatprep.subr.mxu0 0.0
    %2353 = vmatpush1.msra.mxu0 0.0
    %2354 = vmatprep.subr.mxu0 0.0
    %2355 = vmatpush1.msra.mxu0 0.0
    %2356 = vmatprep.subr.mxu0 0.0
    %2357 = vmatpush1.msra.mxu0 0.0
    %2358 = vmatprep.subr.mxu0 0.0
    %2359 = vmatpush1.msra.mxu0 0.0
    %2360 = vmatprep.subr.mxu0 0.0
    %2361 = vmatpush1.msra.mxu0 0.0
    %2362 = vmatprep.subr.mxu0 0.0
    %2363 = vmatpush1.msra.mxu0 0.0
    %2364 = vmatprep.subr.mxu0 0.0
    %2365 = vmatpush1.msra.mxu0 0.0
    %2366 = vmatprep.subr.mxu0 0.0
    %2367 = vmatpush1.msra.mxu0 0.0
    %2368 = vmatprep.subr.mxu0 0.0
    %2369 = vmatpush1.msra.mxu0 0.0
    %2370 = vmatprep.subr.mxu0 0.0
    %2371 = vmatpush1.msra.mxu0 0.0
    %2372 = vmatprep.subr.mxu0 0.0
    %2373 = vmatpush1.msra.mxu0 0.0
    %2374 = vmatprep.subr.mxu0 0.0
    %2375 = vmatpush1.msra.mxu0 0.0
    %2376 = vmatprep.subr.mxu0 0.0
    %2377 = vmatpush1.msra.mxu0 0.0
    %2378 = vmatprep.subr.mxu0 0.0
    %2379 = vmatpush1.msra.mxu0 0.0
    %2380 = vmatprep.subr.mxu0 0.0
    %2381 = vmatpush1.msra.mxu0 0.0
    %2382 = vmatprep.subr.mxu0 0.0
    %2383 = vmatpush1.msra.mxu0 0.0
    %2384 = vmatprep.subr.mxu0 0.0
    %2385 = vmatpush1.msra.mxu0 0.0
    %2386 = vmatprep.subr.mxu0 0.0
    %2387 = vmatpush1.msra.mxu0 0.0
    %2388 = vmatprep.subr.mxu0 0.0
    %2389 = vmatpush1.msra.mxu0 0.0
    %2390 = vmatprep.subr.mxu0 0.0
    %2391 = vmatpush1.msra.mxu0 0.0
    %2392 = vmatprep.subr.mxu0 0.0
    %2393 = vmatpush1.msra.mxu0 0.0
    %2394 = vmatprep.mubr.f32.mxu0 0.0
    %2395 = vmatmul.mubr.f32.gmra.mrb[0].mxu0 %v2328
    %v2396 = vpop.f32.mrb[0].mxu0
    %v2397 = vadd.f32 0.0, %v2396
    %v2398 = vpop.f32.mrb[0].mxu0
    %v2399 = vadd.f32 0.0, %v2398
    %2400 = vdwg.mxu0
    %2401 = vmatprep.subr.mxu0 %v2321
    %2402 = vmatpush1.msra.mxu0 %v2320
    %2403 = vmatprep.subr.mxu0 %v2325
    %2404 = vmatpush1.msra.mxu0 %v2324
    %2405 = vmatprep.subr.mxu0 0.0
    %2406 = vmatpush1.msra.mxu0 0.0
    %2407 = vmatprep.subr.mxu0 0.0
    %2408 = vmatpush1.msra.mxu0 0.0
    %2409 = vmatprep.subr.mxu0 0.0
    %2410 = vmatpush1.msra.mxu0 0.0
    %2411 = vmatprep.subr.mxu0 0.0
    %2412 = vmatpush1.msra.mxu0 0.0
    %2413 = vmatprep.subr.mxu0 0.0
    %2414 = vmatpush1.msra.mxu0 0.0
    %2415 = vmatprep.subr.mxu0 0.0
    %2416 = vmatpush1.msra.mxu0 0.0
    %2417 = vmatprep.subr.mxu0 0.0
    %2418 = vmatpush1.msra.mxu0 0.0
    %2419 = vmatprep.subr.mxu0 0.0
    %2420 = vmatpush1.msra.mxu0 0.0
    %2421 = vmatprep.subr.mxu0 0.0
    %2422 = vmatpush1.msra.mxu0 0.0
    %2423 = vmatprep.subr.mxu0 0.0
    %2424 = vmatpush1.msra.mxu0 0.0
    %2425 = vmatprep.subr.mxu0 0.0
    %2426 = vmatpush1.msra.mxu0 0.0
    %2427 = vmatprep.subr.mxu0 0.0
    %2428 = vmatpush1.msra.mxu0 0.0
    %2429 = vmatprep.subr.mxu0 0.0
    %2430 = vmatpush1.msra.mxu0 0.0
    %2431 = vmatprep.subr.mxu0 0.0
    %2432 = vmatpush1.msra.mxu0 0.0
    %2433 = vmatprep.subr.mxu0 0.0
    %2434 = vmatpush1.msra.mxu0 0.0
    %2435 = vmatprep.subr.mxu0 0.0
    %2436 = vmatpush1.msra.mxu0 0.0
    %2437 = vmatprep.subr.mxu0 0.0
    %2438 = vmatpush1.msra.mxu0 0.0
    %2439 = vmatprep.subr.mxu0 0.0
    %2440 = vmatpush1.msra.mxu0 0.0
    %2441 = vmatprep.subr.mxu0 0.0
    %2442 = vmatpush1.msra.mxu0 0.0
    %2443 = vmatprep.subr.mxu0 0.0
    %2444 = vmatpush1.msra.mxu0 0.0
    %2445 = vmatprep.subr.mxu0 0.0
    %2446 = vmatpush1.msra.mxu0 0.0
    %2447 = vmatprep.subr.mxu0 0.0
    %2448 = vmatpush1.msra.mxu0 0.0
    %2449 = vmatprep.subr.mxu0 0.0
    %2450 = vmatpush1.msra.mxu0 0.0
    %2451 = vmatprep.subr.mxu0 0.0
    %2452 = vmatpush1.msra.mxu0 0.0
    %2453 = vmatprep.subr.mxu0 0.0
    %2454 = vmatpush1.msra.mxu0 0.0
    %2455 = vmatprep.subr.mxu0 0.0
    %2456 = vmatpush1.msra.mxu0 0.0
    %2457 = vmatprep.subr.mxu0 0.0
    %2458 = vmatpush1.msra.mxu0 0.0
    %2459 = vmatprep.subr.mxu0 0.0
    %2460 = vmatpush1.msra.mxu0 0.0
    %2461 = vmatprep.subr.mxu0 0.0
    %2462 = vmatpush1.msra.mxu0 0.0
    %2463 = vmatprep.subr.mxu0 0.0
    %2464 = vmatpush1.msra.mxu0 0.0
    %2465 = vmatprep.mubr.f32.mxu0 0.0
    %2466 = vmatmul.mubr.f32.gmra.mrb[0].mxu0 %v2328
    %v2467 = vpop.f32.mrb[0].mxu0
    %v2468 = vadd.f32 0.0, %v2467
    %v2469 = vpop.f32.mrb[0].mxu0
    %v2470 = vadd.f32 0.0, %v2469
    %2471 = vdwg.mxu0
    %v2472 = vld [vmem:[%s1] sm:$0xff]
    %v2473 = vld [vmem:[%s5] sm:$0xff]
    %v2474 = vld [vmem:[%s5 + $0x20] sm:$0xff]
    %v2475 = vld [vmem:[%s5 + $0x40] sm:$0xff]
    %v2476 = vld [vmem:[%s5 + $0x60] sm:$0xff]
    %vm2477 = vcmask 261120
    %v2479 = vsel %vm2477, %v2472, 0
    %2481 = vmatprep.subr.mxu0 0.0
    %2482 = vmatpush1.msra.mxu0 %v2473
    %2483 = vmatprep.subr.mxu0 0.0
    %2484 = vmatpush1.msra.mxu0 %v2474
    %2485 = vmatprep.subr.mxu0 0.0
    %2486 = vmatpush1.msra.mxu0 %v2475
    %2487 = vmatprep.subr.mxu0 0.0
    %2488 = vmatpush1.msra.mxu0 %v2476
    %2489 = vmatprep.subr.mxu0 0.0
    %2490 = vmatpush1.msra.mxu0 0.0
    %2491 = vmatprep.subr.mxu0 0.0
    %2492 = vmatpush1.msra.mxu0 0.0
    %2493 = vmatprep.subr.mxu0 0.0
    %2494 = vmatpush1.msra.mxu0 0.0
    %2495 = vmatprep.subr.mxu0 0.0
    %2496 = vmatpush1.msra.mxu0 0.0
    %2497 = vmatprep.subr.mxu0 0.0
    %2498 = vmatpush1.msra.mxu0 0.0
    %2499 = vmatprep.subr.mxu0 0.0
    %2500 = vmatpush1.msra.mxu0 0.0
    %2501 = vmatprep.subr.mxu0 0.0
    %2502 = vmatpush1.msra.mxu0 0.0
    %2503 = vmatprep.subr.mxu0 0.0
    %2504 = vmatpush1.msra.mxu0 0.0
    %2505 = vmatprep.subr.mxu0 0.0
    %2506 = vmatpush1.msra.mxu0 0.0
    %2507 = vmatprep.subr.mxu0 0.0
    %2508 = vmatpush1.msra.mxu0 0.0
    %2509 = vmatprep.subr.mxu0 0.0
    %2510 = vmatpush1.msra.mxu0 0.0
    %2511 = vmatprep.subr.mxu0 0.0
    %2512 = vmatpush1.msra.mxu0 0.0
    %2513 = vmatprep.subr.mxu0 0.0
    %2514 = vmatpush1.msra.mxu0 0.0
    %2515 = vmatprep.subr.mxu0 0.0
    %2516 = vmatpush1.msra.mxu0 0.0
    %2517 = vmatprep.subr.mxu0 0.0
    %2518 = vmatpush1.msra.mxu0 0.0
    %2519 = vmatprep.subr.mxu0 0.0
    %2520 = vmatpush1.msra.mxu0 0.0
    %2521 = vmatprep.subr.mxu0 0.0
    %2522 = vmatpush1.msra.mxu0 0.0
    %2523 = vmatprep.subr.mxu0 0.0
    %2524 = vmatpush1.msra.mxu0 0.0
    %2525 = vmatprep.subr.mxu0 0.0
    %2526 = vmatpush1.msra.mxu0 0.0
    %2527 = vmatprep.subr.mxu0 0.0
    %2528 = vmatpush1.msra.mxu0 0.0
    %2529 = vmatprep.subr.mxu0 0.0
    %2530 = vmatpush1.msra.mxu0 0.0
    %2531 = vmatprep.subr.mxu0 0.0
    %2532 = vmatpush1.msra.mxu0 0.0
    %2533 = vmatprep.subr.mxu0 0.0
    %2534 = vmatpush1.msra.mxu0 0.0
    %2535 = vmatprep.subr.mxu0 0.0
    %2536 = vmatpush1.msra.mxu0 0.0
    %2537 = vmatprep.subr.mxu0 0.0
    %2538 = vmatpush1.msra.mxu0 0.0
    %2539 = vmatprep.subr.mxu0 0.0
    %2540 = vmatpush1.msra.mxu0 0.0
    %2541 = vmatprep.subr.mxu0 0.0
    %2542 = vmatpush1.msra.mxu0 0.0
    %2543 = vmatprep.subr.mxu0 0.0
    %2544 = vmatpush1.msra.mxu0 0.0
    %2545 = vmatprep.mubr.f32.mxu0 0.0
    %2546 = vmatmul.mubr.f32.gmra.mrb[0].mxu0 %v2479
    %v2547 = vpop.f32.mrb[0].mxu0
    %v2548 = vadd.f32 %v2397, %v2547
    %v2549 = vpop.f32.mrb[0].mxu0
    %2550 = vdwg.mxu0
    %v2551 = vlaneseq
    %v2552 = vshrl.u32 %v2551, 7
    %v2553 = vsub.s32 0, %v2552
    %v2554 = vrot.slane %v46, %v2553
    %v2555 = vmul.f32 %v2548, %v2554
    %v2556 = vlaneseq
    %v2557 = vshrl.u32 %v2556, 7
    %v2558 = vsub.s32 3, %v2557
    %v2559 = vrot.slane %v46, %v2558
    %v2560 = vadd.f32 %v2555, %v2559
    %v2561 = vmax.f32 %v2560, 0.0
    %v2562 = vld [vmem:[%s5 + $0x8] sm:$0xff]
    %v2563 = vld [vmem:[%s5 + $0x28] sm:$0xff]
    %v2564 = vld [vmem:[%s5 + $0x48] sm:$0xff]
    %v2565 = vld [vmem:[%s5 + $0x68] sm:$0xff]
    %v2566 = vld [vmem:[%s5 + $0x88] sm:$0xff]
    %v2567 = vld [vmem:[%s5 + $0xa8] sm:$0xff]
    %v2568 = vld [vmem:[%s5 + $0xc8] sm:$0xff]
    %v2569 = vld [vmem:[%s5 + $0xe8] sm:$0xff]
    %vm2570 = vcmask 523264
    %v2572 = vsel %vm2570, %v2561, 0
    %2574 = vmatprep.subr.mxu0 0.0
    %2575 = vmatpush1.msra.mxu0 %v2562
    %2576 = vmatprep.subr.mxu0 0.0
    %2577 = vmatpush1.msra.mxu0 %v2563
    %2578 = vmatprep.subr.mxu0 0.0
    %2579 = vmatpush1.msra.mxu0 %v2564
    %2580 = vmatprep.subr.mxu0 0.0
    %2581 = vmatpush1.msra.mxu0 %v2565
    %2582 = vmatprep.subr.mxu0 0.0
    %2583 = vmatpush1.msra.mxu0 %v2566
    %2584 = vmatprep.subr.mxu0 0.0
    %2585 = vmatpush1.msra.mxu0 %v2567
    %2586 = vmatprep.subr.mxu0 0.0
    %2587 = vmatpush1.msra.mxu0 %v2568
    %2588 = vmatprep.subr.mxu0 0.0
    %2589 = vmatpush1.msra.mxu0 %v2569
    %2590 = vmatprep.subr.mxu0 0.0
    %2591 = vmatpush1.msra.mxu0 0.0
    %2592 = vmatprep.subr.mxu0 0.0
    %2593 = vmatpush1.msra.mxu0 0.0
    %2594 = vmatprep.subr.mxu0 0.0
    %2595 = vmatpush1.msra.mxu0 0.0
    %2596 = vmatprep.subr.mxu0 0.0
    %2597 = vmatpush1.msra.mxu0 0.0
    %2598 = vmatprep.subr.mxu0 0.0
    %2599 = vmatpush1.msra.mxu0 0.0
    %2600 = vmatprep.subr.mxu0 0.0
    %2601 = vmatpush1.msra.mxu0 0.0
    %2602 = vmatprep.subr.mxu0 0.0
    %2603 = vmatpush1.msra.mxu0 0.0
    %2604 = vmatprep.subr.mxu0 0.0
    %2605 = vmatpush1.msra.mxu0 0.0
    %2606 = vmatprep.subr.mxu0 0.0
    %2607 = vmatpush1.msra.mxu0 0.0
    %2608 = vmatprep.subr.mxu0 0.0
    %2609 = vmatpush1.msra.mxu0 0.0
    %2610 = vmatprep.subr.mxu0 0.0
    %2611 = vmatpush1.msra.mxu0 0.0
    %2612 = vmatprep.subr.mxu0 0.0
    %2613 = vmatpush1.msra.mxu0 0.0
    %2614 = vmatprep.subr.mxu0 0.0
    %2615 = vmatpush1.msra.mxu0 0.0
    %2616 = vmatprep.subr.mxu0 0.0
    %2617 = vmatpush1.msra.mxu0 0.0
    %2618 = vmatprep.subr.mxu0 0.0
    %2619 = vmatpush1.msra.mxu0 0.0
    %2620 = vmatprep.subr.mxu0 0.0
    %2621 = vmatpush1.msra.mxu0 0.0
    %2622 = vmatprep.subr.mxu0 0.0
    %2623 = vmatpush1.msra.mxu0 0.0
    %2624 = vmatprep.subr.mxu0 0.0
    %2625 = vmatpush1.msra.mxu0 0.0
    %2626 = vmatprep.subr.mxu0 0.0
    %2627 = vmatpush1.msra.mxu0 0.0
    %2628 = vmatprep.subr.mxu0 0.0
    %2629 = vmatpush1.msra.mxu0 0.0
    %2630 = vmatprep.subr.mxu0 0.0
    %2631 = vmatpush1.msra.mxu0 0.0
    %2632 = vmatprep.subr.mxu0 0.0
    %2633 = vmatpush1.msra.mxu0 0.0
    %2634 = vmatprep.subr.mxu0 0.0
    %2635 = vmatpush1.msra.mxu0 0.0
    %2636 = vmatprep.subr.mxu0 0.0
    %2637 = vmatpush1.msra.mxu0 0.0
    %2638 = vmatprep.mubr.f32.mxu0 0.0
    %2639 = vmatmul.mubr.f32.gmra.mrb[0].mxu0 %v2572
    %v2640 = vpop.f32.mrb[0].mxu0
    %v2641 = vadd.f32 %v2399, %v2640
    %v2642 = vpop.f32.mrb[0].mxu0
    %2643 = vdwg.mxu0
    %v2644 = vlaneseq
    %v2645 = vshrl.u32 %v2644, 7
    %v2646 = vsub.s32 1, %v2645
    %v2647 = vrot.slane %v46, %v2646
    %v2648 = vmul.f32 %v2641, %v2647
    %v2649 = vlaneseq
    %v2650 = vshrl.u32 %v2649, 7
    %v2651 = vsub.s32 4, %v2650
    %v2652 = vrot.slane %v46, %v2651
    %v2653 = vadd.f32 %v2648, %v2652
    %v2654 = vmax.f32 %v2653, 0.0
    %v2655 = vld [vmem:[%s5 + $0x10] sm:$0xff]
    %v2656 = vld [vmem:[%s5 + $0x30] sm:$0xff]
    %v2657 = vld [vmem:[%s5 + $0x50] sm:$0xff]
    %v2658 = vld [vmem:[%s5 + $0x70] sm:$0xff]
    %v2659 = vld [vmem:[%s5 + $0x90] sm:$0xff]
    %v2660 = vld [vmem:[%s5 + $0xb0] sm:$0xff]
    %v2661 = vld [vmem:[%s5 + $0xd0] sm:$0xff]
    %v2662 = vld [vmem:[%s5 + $0xf0] sm:$0xff]
    %v2664 = vsel %vm2570, %v2654, 0
    %2666 = vmatprep.subr.mxu0 0.0
    %2667 = vmatpush1.msra.mxu0 %v2655
    %2668 = vmatprep.subr.mxu0 0.0
    %2669 = vmatpush1.msra.mxu0 %v2656
    %2670 = vmatprep.subr.mxu0 0.0
    %2671 = vmatpush1.msra.mxu0 %v2657
    %2672 = vmatprep.subr.mxu0 0.0
    %2673 = vmatpush1.msra.mxu0 %v2658
    %2674 = vmatprep.subr.mxu0 0.0
    %2675 = vmatpush1.msra.mxu0 %v2659
    %2676 = vmatprep.subr.mxu0 0.0
    %2677 = vmatpush1.msra.mxu0 %v2660
    %2678 = vmatprep.subr.mxu0 0.0
    %2679 = vmatpush1.msra.mxu0 %v2661
    %2680 = vmatprep.subr.mxu0 0.0
    %2681 = vmatpush1.msra.mxu0 %v2662
    %2682 = vmatprep.subr.mxu0 0.0
    %2683 = vmatpush1.msra.mxu0 0.0
    %2684 = vmatprep.subr.mxu0 0.0
    %2685 = vmatpush1.msra.mxu0 0.0
    %2686 = vmatprep.subr.mxu0 0.0
    %2687 = vmatpush1.msra.mxu0 0.0
    %2688 = vmatprep.subr.mxu0 0.0
    %2689 = vmatpush1.msra.mxu0 0.0
    %2690 = vmatprep.subr.mxu0 0.0
    %2691 = vmatpush1.msra.mxu0 0.0
    %2692 = vmatprep.subr.mxu0 0.0
    %2693 = vmatpush1.msra.mxu0 0.0
    %2694 = vmatprep.subr.mxu0 0.0
    %2695 = vmatpush1.msra.mxu0 0.0
    %2696 = vmatprep.subr.mxu0 0.0
    %2697 = vmatpush1.msra.mxu0 0.0
    %2698 = vmatprep.subr.mxu0 0.0
    %2699 = vmatpush1.msra.mxu0 0.0
    %2700 = vmatprep.subr.mxu0 0.0
    %2701 = vmatpush1.msra.mxu0 0.0
    %2702 = vmatprep.subr.mxu0 0.0
    %2703 = vmatpush1.msra.mxu0 0.0
    %2704 = vmatprep.subr.mxu0 0.0
    %2705 = vmatpush1.msra.mxu0 0.0
    %2706 = vmatprep.subr.mxu0 0.0
    %2707 = vmatpush1.msra.mxu0 0.0
    %2708 = vmatprep.subr.mxu0 0.0
    %2709 = vmatpush1.msra.mxu0 0.0
    %2710 = vmatprep.subr.mxu0 0.0
    %2711 = vmatpush1.msra.mxu0 0.0
    %2712 = vmatprep.subr.mxu0 0.0
    %2713 = vmatpush1.msra.mxu0 0.0
    %2714 = vmatprep.subr.mxu0 0.0
    %2715 = vmatpush1.msra.mxu0 0.0
    %2716 = vmatprep.subr.mxu0 0.0
    %2717 = vmatpush1.msra.mxu0 0.0
    %2718 = vmatprep.subr.mxu0 0.0
    %2719 = vmatpush1.msra.mxu0 0.0
    %2720 = vmatprep.subr.mxu0 0.0
    %2721 = vmatpush1.msra.mxu0 0.0
    %2722 = vmatprep.subr.mxu0 0.0
    %2723 = vmatpush1.msra.mxu0 0.0
    %2724 = vmatprep.subr.mxu0 0.0
    %2725 = vmatpush1.msra.mxu0 0.0
    %2726 = vmatprep.subr.mxu0 0.0
    %2727 = vmatpush1.msra.mxu0 0.0
    %2728 = vmatprep.subr.mxu0 0.0
    %2729 = vmatpush1.msra.mxu0 0.0
    %2730 = vmatprep.mubr.f32.mxu0 0.0
    %2731 = vmatmul.mubr.f32.gmra.mrb[0].mxu0 %v2664
    %v2732 = vpop.f32.mrb[0].mxu0
    %v2733 = vadd.f32 %v2468, %v2732
    %v2734 = vpop.f32.mrb[0].mxu0
    %2735 = vdwg.mxu0
    %v2736 = vlaneseq
    %v2737 = vshrl.u32 %v2736, 7
    %v2738 = vsub.s32 2, %v2737
    %v2739 = vrot.slane %v46, %v2738
    %v2740 = vmul.f32 %v2733, %v2739
    %v2741 = vlaneseq
    %v2742 = vshrl.u32 %v2741, 7
    %v2743 = vsub.s32 5, %v2742
    %v2744 = vrot.slane %v46, %v2743
    %v2745 = vadd.f32 %v2740, %v2744
    %v2746 = vmax.f32 %v2745, 0.0
    %v2747 = vld [vmem:[%s5 + $0x18] sm:$0xff]
    %v2748 = vld [vmem:[%s5 + $0x38] sm:$0xff]
    %v2749 = vld [vmem:[%s5 + $0x58] sm:$0xff]
    %v2750 = vld [vmem:[%s5 + $0x78] sm:$0xff]
    %v2751 = vld [vmem:[%s5 + $0x98] sm:$0xff]
    %v2752 = vld [vmem:[%s5 + $0xb8] sm:$0xff]
    %v2753 = vld [vmem:[%s5 + $0xd8] sm:$0xff]
    %v2754 = vld [vmem:[%s5 + $0xf8] sm:$0xff]
    %v2756 = vsel %vm2570, %v2746, 0
    %2758 = vmatprep.subr.mxu0 0.0
    %2759 = vmatpush1.msra.mxu0 %v2747
    %2760 = vmatprep.subr.mxu0 0.0
    %2761 = vmatpush1.msra.mxu0 %v2748
    %2762 = vmatprep.subr.mxu0 0.0
    %2763 = vmatpush1.msra.mxu0 %v2749
    %2764 = vmatprep.subr.mxu0 0.0
    %2765 = vmatpush1.msra.mxu0 %v2750
    %2766 = vmatprep.subr.mxu0 0.0
    %2767 = vmatpush1.msra.mxu0 %v2751
    %2768 = vmatprep.subr.mxu0 0.0
    %2769 = vmatpush1.msra.mxu0 %v2752
    %2770 = vmatprep.subr.mxu0 0.0
    %2771 = vmatpush1.msra.mxu0 %v2753
    %2772 = vmatprep.subr.mxu0 0.0
    %2773 = vmatpush1.msra.mxu0 %v2754
    %2774 = vmatprep.subr.mxu0 0.0
    %2775 = vmatpush1.msra.mxu0 0.0
    %2776 = vmatprep.subr.mxu0 0.0
    %2777 = vmatpush1.msra.mxu0 0.0
    %2778 = vmatprep.subr.mxu0 0.0
    %2779 = vmatpush1.msra.mxu0 0.0
    %2780 = vmatprep.subr.mxu0 0.0
    %2781 = vmatpush1.msra.mxu0 0.0
    %2782 = vmatprep.subr.mxu0 0.0
    %2783 = vmatpush1.msra.mxu0 0.0
    %2784 = vmatprep.subr.mxu0 0.0
    %2785 = vmatpush1.msra.mxu0 0.0
    %2786 = vmatprep.subr.mxu0 0.0
    %2787 = vmatpush1.msra.mxu0 0.0
    %2788 = vmatprep.subr.mxu0 0.0
    %2789 = vmatpush1.msra.mxu0 0.0
    %2790 = vmatprep.subr.mxu0 0.0
    %2791 = vmatpush1.msra.mxu0 0.0
    %2792 = vmatprep.subr.mxu0 0.0
    %2793 = vmatpush1.msra.mxu0 0.0
    %2794 = vmatprep.subr.mxu0 0.0
    %2795 = vmatpush1.msra.mxu0 0.0
    %2796 = vmatprep.subr.mxu0 0.0
    %2797 = vmatpush1.msra.mxu0 0.0
    %2798 = vmatprep.subr.mxu0 0.0
    %2799 = vmatpush1.msra.mxu0 0.0
    %2800 = vmatprep.subr.mxu0 0.0
    %2801 = vmatpush1.msra.mxu0 0.0
    %2802 = vmatprep.subr.mxu0 0.0
    %2803 = vmatpush1.msra.mxu0 0.0
    %2804 = vmatprep.subr.mxu0 0.0
    %2805 = vmatpush1.msra.mxu0 0.0
    %2806 = vmatprep.subr.mxu0 0.0
    %2807 = vmatpush1.msra.mxu0 0.0
    %2808 = vmatprep.subr.mxu0 0.0
    %2809 = vmatpush1.msra.mxu0 0.0
    %2810 = vmatprep.subr.mxu0 0.0
    %2811 = vmatpush1.msra.mxu0 0.0
    %2812 = vmatprep.subr.mxu0 0.0
    %2813 = vmatpush1.msra.mxu0 0.0
    %2814 = vmatprep.subr.mxu0 0.0
    %2815 = vmatpush1.msra.mxu0 0.0
    %2816 = vmatprep.subr.mxu0 0.0
    %2817 = vmatpush1.msra.mxu0 0.0
    %2818 = vmatprep.subr.mxu0 0.0
    %2819 = vmatpush1.msra.mxu0 0.0
    %2820 = vmatprep.subr.mxu0 0.0
    %2821 = vmatpush1.msra.mxu0 0.0
    %2822 = vmatprep.mubr.f32.mxu0 0.0
    %2823 = vmatmul.mubr.f32.gmra.mrb[0].mxu0 %v2756
    %v2824 = vpop.f32.mrb[0].mxu0
    %v2825 = vadd.f32 %v2470, %v2824
    %v2826 = vpop.f32.mrb[0].mxu0
    %2827 = vdwg.mxu0
    %v2828 = vlaneseq
    %v2829 = vshrl.u32 %v2828, 7
    %v2830 = vsub.s32 7, %v2829
    %v2831 = vrot.slane %v46, %v2830
    %v2832 = vadd.f32 %v2825, %v2831
    %2833 = vst [vmem:[#allocation5] sm:$0xff] %v2832
    %2834 = vst.msk [vmem:[#allocation5] sm:$0xff] %vm2326, %v2315
    // Predicated region
    $region38: #{tpu_custom_call.1} parent=1 // pred_check
      _
    $region39: #{tpu_custom_call.1} parent=1 // pred_check_branch
      %2836 = sbr.rel (0) target = $region41
    $region40: #{tpu_custom_call.1} parent=1 // pred_region
      %s2838 = ssub.s32 128, 128
      %2839 = vsyncadd [#allocation4], %s2838
      %s2841 = sshll.u32 [#allocation5], 4
      %s2842 = int_to_ptr.vmem [resolvable:$true] %s2841
      %2844 = dma.vmem_to_hbm [thread:$0]  %s2842, 128, %s8, [#allocation4]
    $region41: #{tpu_custom_call.1} parent=1 // pred_fallthru
      _
    // Predicated region
    $region42: #{tpu_custom_call.1} parent=1 // pred_check
      _
    $region43: #{tpu_custom_call.1} parent=1 // pred_check_branch
      %2846 = sbr.rel (0) target = $region45
    $region44: #{tpu_custom_call.1} parent=1 // pred_region
      %2847 = dma.done [#allocation4], 128
    $region45: #{tpu_custom_call.1} parent=1 // pred_fallthru
      _
    %2848 = vsyncpa [#allocation3], 1
    %2849 = vsyncpa [#allocation4], 1

</llo_original>
